<compile_context>
chip_gen: v6e
topology: v6e:2x2x1
jax: 0.10.0
libtpu: 0.0.40
codegen_flags: <defaults>
</compile_context>

<pallas_src>
import functools

import jax
import jax.numpy as jnp
from jax.experimental import pallas as pl
from jax.experimental.pallas import tpu as pltpu


def _round_up(x, m):
    return ((x + m - 1) // m) * m


# ---------------------------------------------------------------------------
# Kernels
# ---------------------------------------------------------------------------

def _fused_kernel(vec_ref, cur_ref, w_v_ref, w_s_ref, wt_s_ref,
                  b_rz_ref, bt_ref, out_ref):
    """Fused-gate variant (D % 128 == 0: gate slices land on lane-tile boundaries).

    vec_ref  : [tm, 2D]          cur_ref : [tm, D]
    w_v_ref  : [2D, 3D] = [Wr_v | Wz_v | Wt_v]
    w_s_ref  : [D, 2D]  = [Wr_s | Wz_s]        wt_s_ref : [D, D]
    b_rz_ref : [1, 2D]  = [br | bz]            bt_ref   : [1, D]
    out_ref  : [tm, D]
    """
    D = out_ref.shape[-1]
    vec = vec_ref[...]                       # native dtype straight to the MXU
    cur = cur_ref[...]

    vv = jnp.dot(vec, w_v_ref[...], preferred_element_type=jnp.float32)   # [tm, 3D]
    cs = jnp.dot(cur, w_s_ref[...], preferred_element_type=jnp.float32)   # [tm, 2D]

    rz = jax.nn.sigmoid(vv[:, :2 * D] + cs + b_rz_ref[...])               # [tm, 2D]
    r = rz[:, :D]
    z = rz[:, D:]

    rc = (r * cur).astype(wt_s_ref.dtype)    # keep MXU operand dtypes matched
    h_hat = jnp.tanh(vv[:, 2 * D:]
                     + jnp.dot(rc, wt_s_ref[...], preferred_element_type=jnp.float32)
                     + bt_ref[...])

    out = (1.0 - z) * cur + z * h_hat        # f32 epilogue via promotion
    out_ref[...] = out.astype(out_ref.dtype)


def _split_kernel(vec_ref, cur_ref,
                  wr_v_ref, wr_s_ref, wz_v_ref, wz_s_ref, wt_v_ref, wt_s_ref,
                  br_ref, bz_ref, bt_ref, out_ref):
    """Per-gate variant (D % 128 != 0): no sub-128-lane value slices anywhere."""
    vec = vec_ref[...]
    cur = cur_ref[...]
    f32 = jnp.float32

    r = jax.nn.sigmoid(jnp.dot(vec, wr_v_ref[...], preferred_element_type=f32)
                       + jnp.dot(cur, wr_s_ref[...], preferred_element_type=f32)
                       + br_ref[...])
    z = jax.nn.sigmoid(jnp.dot(vec, wz_v_ref[...], preferred_element_type=f32)
                       + jnp.dot(cur, wz_s_ref[...], preferred_element_type=f32)
                       + bz_ref[...])
    rc = (r * cur).astype(wt_s_ref.dtype)
    h_hat = jnp.tanh(jnp.dot(vec, wt_v_ref[...], preferred_element_type=f32)
                     + jnp.dot(rc, wt_s_ref[...], preferred_element_type=f32)
                     + bt_ref[...])

    out = (1.0 - z) * cur + z * h_hat
    out_ref[...] = out.astype(out_ref.dtype)


# ---------------------------------------------------------------------------
# Tiling / VMEM budgeting
# ---------------------------------------------------------------------------

def _choose_tm(M, D, act_isz, w_isz):
    """Largest row tile that fits the VMEM budget (HBM-bound: bigger is better)."""
    weight_bytes = 9 * D * D * w_isz                 # single-buffered (Buffered(1))
    budget = (40 << 20) - weight_bytes               # headroom under the 48 MiB cap
    # double-buffered in/out tiles + one copy of the f32 intermediates
    per_row = 2 * 4 * D * act_isz + 12 * D * 4
    tm = budget // per_row if budget > 0 else 256
    tm = min(tm, 4096)
    # keep >= 2 (and even) grid steps when M allows, so v7x's two TCs both get work
    tm = min(tm, _round_up(pl.cdiv(M, 2), 256))
    tm = min(tm, _round_up(M, 256))                  # don't exceed one padded tile
    tm = max(256, (tm // 256) * 256)                 # MXU-friendly, f32/bf16 legal
    return int(tm)


def _vmem_limit(tm, D, act_isz, w_isz):
    """Actual footprint + slack, capped at 48 MiB (v7x physical VMEM is 64 MiB/TC)."""
    weight_bytes = 9 * D * D * w_isz + 3 * D * 4     # single-buffered weights + biases
    act_bytes = 2 * tm * 3 * D * act_isz             # vec + cur, double buffered
    out_bytes = 2 * tm * D * act_isz                 # out, double buffered
    temp_bytes = 12 * tm * D * 4                     # f32 intermediates
    need = weight_bytes + act_bytes + out_bytes + temp_bytes + (4 << 20)
    return int(min(48 << 20, max(32 << 20, need)))


# ---------------------------------------------------------------------------
# Wrapper
# ---------------------------------------------------------------------------

@functools.partial(jax.jit, static_argnames=("tm",))
def propagator1(cur_state, vec, packed_params, *, tm=None):
    """cur_state: [B, N, D], vec: [B, N, 2D] -> [B, N, D]."""
    B, N, D = cur_state.shape
    assert vec.shape == (B, N, 2 * D)
    assert cur_state.dtype == vec.dtype
    fused = len(packed_params) == 5
    n_w = 3 if fused else 6

    act_dtype = vec.dtype
    # Matmul operands must share a dtype: weights follow the activation dtype;
    # biases stay f32 (they are added into the f32 accumulators in the epilogue).
    weights = tuple(w.astype(act_dtype) for w in packed_params[:n_w])
    biases = tuple(b.astype(jnp.float32) for b in packed_params[n_w:])

    M = B * N
    vec2d = vec.reshape(M, 2 * D)
    cur2d = cur_state.reshape(M, D)

    act_isz = jnp.dtype(act_dtype).itemsize
    w_isz = act_isz
    if tm is None:
        tm_eff = _choose_tm(M, D, act_isz, w_isz)
    else:
        tm_eff = max(16, (int(tm) // 16) * 16)       # explicit override (tests)
    grid = (pl.cdiv(M, tm_eff),)

    def rows(shape):
        return pl.BlockSpec(shape, lambda i: (i, 0))

    def const(shape):
        # Grid-invariant operand: fetched once; single-buffer it so it doesn't
        # reserve 2x its size in VMEM (frees budget for larger row tiles).
        return pl.BlockSpec(shape, lambda i: tuple(0 for _ in shape),
                            pipeline_mode=pl.Buffered(1))

    if fused:
        kernel = _fused_kernel
        w_specs = [const((2 * D, 3 * D)), const((D, 2 * D)), const((D, D)),
                   const((1, 2 * D)), const((1, D))]
    else:
        kernel = _split_kernel
        w_specs = [const((2 * D, D)), const((D, D)),
                   const((2 * D, D)), const((D, D)),
                   const((2 * D, D)), const((D, D)),
                   const((1, D)), const((1, D)), const((1, D))]

    out2d = pl.pallas_call(
        kernel,
        out_shape=jax.ShapeDtypeStruct((M, D), act_dtype),
        grid_spec=pltpu.PrefetchScalarGridSpec(
            num_scalar_prefetch=0,
            grid=grid,
            in_specs=[rows((tm_eff, 2 * D)), rows((tm_eff, D))] + w_specs,
            out_specs=rows((tm_eff, D)),
        ),
        compiler_params=pltpu.CompilerParams(
            dimension_semantics=("parallel",),
            vmem_limit_bytes=_vmem_limit(tm_eff, D, act_isz, w_isz)),
    )(vec2d, cur2d, *weights, *biases)

    return out2d.reshape(B, N, D)


# ---------------------------------------------------------------------------
# Parameters (PyTorch Linear(3D -> D) weights, stored transposed and split)
# ---------------------------------------------------------------------------

def init_params(key, state_dim):
    D = state_dim
    ks = jax.random.split(key, 6)
    scale = 1.0 / jnp.sqrt(3.0 * D)

    def lin(kw, kb):
        w = jax.random.uniform(kw, (3 * D, D), jnp.float32, -scale, scale)
        b = jax.random.uniform(kb, (1, D), jnp.float32, -scale, scale)
        return w[:2 * D, :], w[2 * D:, :], b

    wr_v, wr_s, br = lin(ks[0], ks[1])
    wz_v, wz_s, bz = lin(ks[2], ks[3])
    wt_v, wt_s, bt = lin(ks[4], ks[5])
    return (wr_v, wr_s, wz_v, wz_s, wt_v, wt_s, br, bz, bt)


def pack_params(params, *, dtype=None):
    """Pre-fuse / cast weights once (outside the per-call path).

    Returns a 5-tuple (fused gate weights, 3 matmuls) when D % 128 == 0, else a
    9-tuple of per-gate weights (6 matmuls, no sub-128-lane value slices).
    Pass dtype=jnp.bfloat16 to store weights in bf16 (halves HBM weight traffic).
    """
    wr_v, wr_s, wz_v, wz_s, wt_v, wt_s, br, bz, bt = params
    D = wr_s.shape[0]
    cast = (lambda x: x.astype(dtype)) if dtype is not None else (lambda x: x)
    if D % 128 == 0:
        return (cast(jnp.concatenate([wr_v, wz_v, wt_v], axis=1)),      # [2D, 3D]
                cast(jnp.concatenate([wr_s, wz_s], axis=1)),            # [D, 2D]
                cast(wt_s),                                             # [D, D]
                jnp.concatenate([br, bz], axis=1).astype(jnp.float32),  # [1, 2D]
                bt.astype(jnp.float32))                                 # [1, D]
    return (cast(wr_v), cast(wr_s), cast(wz_v), cast(wz_s), cast(wt_v), cast(wt_s),
            br.astype(jnp.float32), bz.astype(jnp.float32), bt.astype(jnp.float32))


def propagator1_ref(cur_state, vec, params):
    """Pure-JAX reference matching the PyTorch forward (eval mode)."""
    wr_v, wr_s, wz_v, wz_s, wt_v, wt_s, br, bz, bt = params
    wr = jnp.concatenate([wr_v, wr_s], axis=0)
    wz = jnp.concatenate([wz_v, wz_s], axis=0)
    wt = jnp.concatenate([wt_v, wt_s], axis=0)
    a = jnp.concatenate([vec, cur_state], axis=-1)
    r = jax.nn.sigmoid(a @ wr + br[0])
    z = jax.nn.sigmoid(a @ wz + bz[0])
    joined = jnp.concatenate([vec, r * cur_state], axis=-1)
    h_hat = jnp.tanh(joined @ wt + bt[0])
    return (1.0 - z) * cur_state + z * h_hat


if __name__ == "__main__":
    key = jax.random.PRNGKey(0)
    k1, k2, k3, k4, k5, k6, k7, k8 = jax.random.split(key, 8)

    # --- small problem, D = 32 (per-gate path since D % 128 != 0) ---
    B, N, D = 2, 8, 32
    cur = jax.random.normal(k1, (B, N, D), jnp.float32)
    vec = jax.random.normal(k2, (B, N, 2 * D), jnp.float32)
    params = init_params(k3, D)
    packed = pack_params(params)

    out = jax.block_until_ready(propagator1(cur, vec, packed))
    ref = propagator1_ref(cur, vec, params)
    assert out.shape == (B, N, D)
    assert jnp.allclose(out, ref, atol=2e-5, rtol=2e-5), "mismatch vs reference (D=32)"

    # --- ragged multi-tile grid (M = 111, explicit tm = 64 -> 2 row tiles) ---
    B2, N2 = 3, 37
    cur2 = jax.random.normal(k4, (B2, N2, D), jnp.float32)
    vec2 = jax.random.normal(k5, (B2, N2, 2 * D), jnp.float32)
    out2 = jax.block_until_ready(propagator1(cur2, vec2, packed, tm=64))
    ref2 = propagator1_ref(cur2, vec2, params)
    assert jnp.allclose(out2, ref2, atol=2e-5, rtol=2e-5), "mismatch vs reference (ragged)"

    # --- D = 128 exercises the fused-gate path (lane-aligned slices) ---
    D3 = 128
    cur3 = jax.random.normal(k6, (B, N, D3), jnp.float32)
    vec3 = jax.random.normal(k7, (B, N, 2 * D3), jnp.float32)
    params3 = init_params(k8, D3)
    packed3 = pack_params(params3)
    out3 = jax.block_until_ready(propagator1(cur3, vec3, packed3))
    ref3 = propagator1_ref(cur3, vec3, params3)
    assert jnp.allclose(out3, ref3, atol=1e-4, rtol=1e-4), "mismatch vs reference (D=128)"

    # --- bf16 activations + weights (halves HBM traffic on the mem-bound path) ---
    packed_bf16 = pack_params(params, dtype=jnp.bfloat16)
    out_bf16 = jax.block_until_ready(
        propagator1(cur.astype(jnp.bfloat16), vec.astype(jnp.bfloat16), packed_bf16))
    assert jnp.allclose(out_bf16.astype(jnp.float32), ref, atol=0.1, rtol=0.1), \
        "mismatch vs reference (bf16)"

    print("KERNEL_OK")
</pallas_src>

<mosaic_0001>
module attributes {stable_mosaic.version = 11 : i64} {
  func.func @_split_kernel(%arg0: i32, %arg1: memref<256x64xf32, #tpu.memory_space<vmem>>, %arg2: memref<256x32xf32, #tpu.memory_space<vmem>>, %arg3: memref<64x32xf32, #tpu.memory_space<vmem>>, %arg4: memref<32x32xf32, #tpu.memory_space<vmem>>, %arg5: memref<64x32xf32, #tpu.memory_space<vmem>>, %arg6: memref<32x32xf32, #tpu.memory_space<vmem>>, %arg7: memref<64x32xf32, #tpu.memory_space<vmem>>, %arg8: memref<32x32xf32, #tpu.memory_space<vmem>>, %arg9: memref<1x32xf32, #tpu.memory_space<vmem>>, %arg10: memref<1x32xf32, #tpu.memory_space<vmem>>, %arg11: memref<1x32xf32, #tpu.memory_space<vmem>>, %arg12: memref<256x32xf32, #tpu.memory_space<vmem>>) attributes {dimension_semantics = [#tpu.dimension_semantics<parallel>], iteration_bounds = array<i64: 1>, scalar_prefetch = 0 : i64, scratch_operands = 0 : i64, tpu.core_type = #tpu.core_type<tc>, window_params = [{transform_indices = @transform_0, window_bounds = array<i64: 256, 64>}, {transform_indices = @transform_1, window_bounds = array<i64: 256, 32>}, {pipeline_mode = #tpu.pipeline_mode<synchronous>, transform_indices = @transform_2, window_bounds = array<i64: 64, 32>}, {pipeline_mode = #tpu.pipeline_mode<synchronous>, transform_indices = @transform_3, window_bounds = array<i64: 32, 32>}, {pipeline_mode = #tpu.pipeline_mode<synchronous>, transform_indices = @transform_4, window_bounds = array<i64: 64, 32>}, {pipeline_mode = #tpu.pipeline_mode<synchronous>, transform_indices = @transform_5, window_bounds = array<i64: 32, 32>}, {pipeline_mode = #tpu.pipeline_mode<synchronous>, transform_indices = @transform_6, window_bounds = array<i64: 64, 32>}, {pipeline_mode = #tpu.pipeline_mode<synchronous>, transform_indices = @transform_7, window_bounds = array<i64: 32, 32>}, {pipeline_mode = #tpu.pipeline_mode<synchronous>, transform_indices = @transform_8, window_bounds = array<i64: 1, 32>}, {pipeline_mode = #tpu.pipeline_mode<synchronous>, transform_indices = @transform_9, window_bounds = array<i64: 1, 32>}, {pipeline_mode = #tpu.pipeline_mode<synchronous>, transform_indices = @transform_10, window_bounds = array<i64: 1, 32>}, {transform_indices = @transform_11, window_bounds = array<i64: 256, 32>}]} {
    %c0 = arith.constant 0 : index
    %c0_0 = arith.constant 0 : index
    %0 = vector.load %arg1[%c0, %c0_0] : memref<256x64xf32, #tpu.memory_space<vmem>>, vector<256x64xf32>
    %c0_1 = arith.constant 0 : index
    %c0_2 = arith.constant 0 : index
    %1 = vector.load %arg2[%c0_1, %c0_2] : memref<256x32xf32, #tpu.memory_space<vmem>>, vector<256x32xf32>
    %c0_3 = arith.constant 0 : index
    %c0_4 = arith.constant 0 : index
    %2 = vector.load %arg3[%c0_3, %c0_4] : memref<64x32xf32, #tpu.memory_space<vmem>>, vector<64x32xf32>
    %cst = arith.constant dense<0.000000e+00> : vector<256x32xf32>
    %3 = tpu.matmul %0, %2, %cst {dimension_numbers = #tpu.dot_dimension_numbers<[1], [0], [0], [1], [0, 0, 1, 1], [], []>} : vector<256x64xf32>, vector<64x32xf32>, vector<256x32xf32> -> vector<256x32xf32>
    %c0_5 = arith.constant 0 : index
    %c0_6 = arith.constant 0 : index
    %4 = vector.load %arg4[%c0_5, %c0_6] : memref<32x32xf32, #tpu.memory_space<vmem>>, vector<32x32xf32>
    %cst_7 = arith.constant dense<0.000000e+00> : vector<256x32xf32>
    %5 = tpu.matmul %1, %4, %cst_7 {dimension_numbers = #tpu.dot_dimension_numbers<[1], [0], [0], [1], [0, 0, 1, 1], [], []>} : vector<256x32xf32>, vector<32x32xf32>, vector<256x32xf32> -> vector<256x32xf32>
    %6 = arith.addf %3, %5 : vector<256x32xf32>
    %c0_8 = arith.constant 0 : index
    %c0_9 = arith.constant 0 : index
    %7 = vector.load %arg9[%c0_8, %c0_9] : memref<1x32xf32, #tpu.memory_space<vmem>>, vector<1x32xf32>
    %8 = vector.broadcast %7 : vector<1x32xf32> to vector<256x32xf32>
    %9 = arith.addf %6, %8 : vector<256x32xf32>
    %10 = arith.negf %9 : vector<256x32xf32>
    %11 = math.exp %10 : vector<256x32xf32>
    %cst_10 = arith.constant 1.000000e+00 : f32
    %12 = vector.broadcast %cst_10 : f32 to vector<256x32xf32>
    %13 = arith.addf %12, %11 : vector<256x32xf32>
    %14 = arith.divf %12, %13 : vector<256x32xf32>
    %c0_11 = arith.constant 0 : index
    %c0_12 = arith.constant 0 : index
    %15 = vector.load %arg5[%c0_11, %c0_12] : memref<64x32xf32, #tpu.memory_space<vmem>>, vector<64x32xf32>
    %cst_13 = arith.constant dense<0.000000e+00> : vector<256x32xf32>
    %16 = tpu.matmul %0, %15, %cst_13 {dimension_numbers = #tpu.dot_dimension_numbers<[1], [0], [0], [1], [0, 0, 1, 1], [], []>} : vector<256x64xf32>, vector<64x32xf32>, vector<256x32xf32> -> vector<256x32xf32>
    %c0_14 = arith.constant 0 : index
    %c0_15 = arith.constant 0 : index
    %17 = vector.load %arg6[%c0_14, %c0_15] : memref<32x32xf32, #tpu.memory_space<vmem>>, vector<32x32xf32>
    %cst_16 = arith.constant dense<0.000000e+00> : vector<256x32xf32>
    %18 = tpu.matmul %1, %17, %cst_16 {dimension_numbers = #tpu.dot_dimension_numbers<[1], [0], [0], [1], [0, 0, 1, 1], [], []>} : vector<256x32xf32>, vector<32x32xf32>, vector<256x32xf32> -> vector<256x32xf32>
    %19 = arith.addf %16, %18 : vector<256x32xf32>
    %c0_17 = arith.constant 0 : index
    %c0_18 = arith.constant 0 : index
    %20 = vector.load %arg10[%c0_17, %c0_18] : memref<1x32xf32, #tpu.memory_space<vmem>>, vector<1x32xf32>
    %21 = vector.broadcast %20 : vector<1x32xf32> to vector<256x32xf32>
    %22 = arith.addf %19, %21 : vector<256x32xf32>
    %23 = arith.negf %22 : vector<256x32xf32>
    %24 = math.exp %23 : vector<256x32xf32>
    %cst_19 = arith.constant 1.000000e+00 : f32
    %25 = vector.broadcast %cst_19 : f32 to vector<256x32xf32>
    %26 = arith.addf %25, %24 : vector<256x32xf32>
    %27 = arith.divf %25, %26 : vector<256x32xf32>
    %28 = arith.mulf %14, %1 : vector<256x32xf32>
    %c0_20 = arith.constant 0 : index
    %c0_21 = arith.constant 0 : index
    %29 = vector.load %arg7[%c0_20, %c0_21] : memref<64x32xf32, #tpu.memory_space<vmem>>, vector<64x32xf32>
    %cst_22 = arith.constant dense<0.000000e+00> : vector<256x32xf32>
    %30 = tpu.matmul %0, %29, %cst_22 {dimension_numbers = #tpu.dot_dimension_numbers<[1], [0], [0], [1], [0, 0, 1, 1], [], []>} : vector<256x64xf32>, vector<64x32xf32>, vector<256x32xf32> -> vector<256x32xf32>
    %c0_23 = arith.constant 0 : index
    %c0_24 = arith.constant 0 : index
    %31 = vector.load %arg8[%c0_23, %c0_24] : memref<32x32xf32, #tpu.memory_space<vmem>>, vector<32x32xf32>
    %cst_25 = arith.constant dense<0.000000e+00> : vector<256x32xf32>
    %32 = tpu.matmul %28, %31, %cst_25 {dimension_numbers = #tpu.dot_dimension_numbers<[1], [0], [0], [1], [0, 0, 1, 1], [], []>} : vector<256x32xf32>, vector<32x32xf32>, vector<256x32xf32> -> vector<256x32xf32>
    %33 = arith.addf %30, %32 : vector<256x32xf32>
    %c0_26 = arith.constant 0 : index
    %c0_27 = arith.constant 0 : index
    %34 = vector.load %arg11[%c0_26, %c0_27] : memref<1x32xf32, #tpu.memory_space<vmem>>, vector<1x32xf32>
    %35 = vector.broadcast %34 : vector<1x32xf32> to vector<256x32xf32>
    %36 = arith.addf %33, %35 : vector<256x32xf32>
    %37 = math.tanh %36 : vector<256x32xf32>
    %cst_28 = arith.constant 1.000000e+00 : f32
    %38 = vector.broadcast %cst_28 : f32 to vector<256x32xf32>
    %39 = arith.subf %38, %27 : vector<256x32xf32>
    %40 = arith.mulf %39, %1 : vector<256x32xf32>
    %41 = arith.mulf %27, %37 : vector<256x32xf32>
    %42 = arith.addf %40, %41 : vector<256x32xf32>
    %c0_29 = arith.constant 0 : index
    %c0_30 = arith.constant 0 : index
    %43 = vector.load %arg12[%c0_29, %c0_30] : memref<256x32xf32, #tpu.memory_space<vmem>>, vector<256x32xf32>
    tpu.vector_store %arg12[%c0_29, %c0_30], %42 {strides = array<i32>} : memref<256x32xf32, #tpu.memory_space<vmem>>, vector<256x32xf32>,
    return
  }
  func.func @transform_0(%arg0: i32) -> (i32, i32) {
    %c0_i32 = arith.constant 0 : i32
    %c0_i32_0 = arith.constant 0 : i32
    return %arg0, %c0_i32 : i32, i32
  }
  func.func @transform_1(%arg0: i32) -> (i32, i32) {
    %c0_i32 = arith.constant 0 : i32
    %c0_i32_0 = arith.constant 0 : i32
    return %arg0, %c0_i32 : i32, i32
  }
  func.func @transform_2(%arg0: i32) -> (i32, i32) {
    %c0_i32 = arith.constant 0 : i32
    %c0_i32_0 = arith.constant 0 : i32
    %c0_i32_1 = arith.constant 0 : i32
    return %c0_i32, %c0_i32_0 : i32, i32
  }
  func.func @transform_3(%arg0: i32) -> (i32, i32) {
    %c0_i32 = arith.constant 0 : i32
    %c0_i32_0 = arith.constant 0 : i32
    %c0_i32_1 = arith.constant 0 : i32
    return %c0_i32, %c0_i32_0 : i32, i32
  }
  func.func @transform_4(%arg0: i32) -> (i32, i32) {
    %c0_i32 = arith.constant 0 : i32
    %c0_i32_0 = arith.constant 0 : i32
    %c0_i32_1 = arith.constant 0 : i32
    return %c0_i32, %c0_i32_0 : i32, i32
  }
  func.func @transform_5(%arg0: i32) -> (i32, i32) {
    %c0_i32 = arith.constant 0 : i32
    %c0_i32_0 = arith.constant 0 : i32
    %c0_i32_1 = arith.constant 0 : i32
    return %c0_i32, %c0_i32_0 : i32, i32
  }
  func.func @transform_6(%arg0: i32) -> (i32, i32) {
    %c0_i32 = arith.constant 0 : i32
    %c0_i32_0 = arith.constant 0 : i32
    %c0_i32_1 = arith.constant 0 : i32
    return %c0_i32, %c0_i32_0 : i32, i32
  }
  func.func @transform_7(%arg0: i32) -> (i32, i32) {
    %c0_i32 = arith.constant 0 : i32
    %c0_i32_0 = arith.constant 0 : i32
    %c0_i32_1 = arith.constant 0 : i32
    return %c0_i32, %c0_i32_0 : i32, i32
  }
  func.func @transform_8(%arg0: i32) -> (i32, i32) {
    %c0_i32 = arith.constant 0 : i32
    %c0_i32_0 = arith.constant 0 : i32
    %c0_i32_1 = arith.constant 0 : i32
    return %c0_i32, %c0_i32_0 : i32, i32
  }
  func.func @transform_9(%arg0: i32) -> (i32, i32) {
    %c0_i32 = arith.constant 0 : i32
    %c0_i32_0 = arith.constant 0 : i32
    %c0_i32_1 = arith.constant 0 : i32
    return %c0_i32, %c0_i32_0 : i32, i32
  }
  func.func @transform_10(%arg0: i32) -> (i32, i32) {
    %c0_i32 = arith.constant 0 : i32
    %c0_i32_0 = arith.constant 0 : i32
    %c0_i32_1 = arith.constant 0 : i32
    return %c0_i32, %c0_i32_0 : i32, i32
  }
  func.func @transform_11(%arg0: i32) -> (i32, i32) {
    %c0_i32 = arith.constant 0 : i32
    %c0_i32_0 = arith.constant 0 : i32
    return %arg0, %c0_i32 : i32, i32
  }
}

</mosaic_0001>

<llo_original>
// kernel: propagator1.1
$region0: #{propagator1.1}
  #allocation0 [shape = 'u32[]', space=smem, size = 0x4, offset = 0x4, fixed_abs, tag = 'smem constant byte address 0x4 - core index']
  #allocation1 [shape = 'u32[144,128]{1,0:T(1,128)}', space=vmem, size = 0x12000, scoped, tag = 'internal scratch']
  %s0 = inlined_call_operand.vmem [shape: f32[16,64], index: 0, kind: input, shape index: {}]
  %s1 = inlined_call_operand.vmem [shape: f32[16,32], index: 1, kind: input, shape index: {}]
  %s2 = inlined_call_operand.vmem [shape: f32[64,32], index: 2, kind: input, shape index: {}]
  %s3 = inlined_call_operand.vmem [shape: f32[32,32], index: 3, kind: input, shape index: {}]
  %s4 = inlined_call_operand.vmem [shape: f32[64,32], index: 4, kind: input, shape index: {}]
  %s5 = inlined_call_operand.vmem [shape: f32[32,32], index: 5, kind: input, shape index: {}]
  %s6 = inlined_call_operand.vmem [shape: f32[64,32], index: 6, kind: input, shape index: {}]
  %s7 = inlined_call_operand.vmem [shape: f32[32,32], index: 7, kind: input, shape index: {}]
  %s8 = inlined_call_operand.vmem [shape: f32[1,32], index: 8, kind: input, shape index: {}]
  %s9 = inlined_call_operand.vmem [shape: f32[1,32], index: 9, kind: input, shape index: {}]
  %s10 = inlined_call_operand.vmem [shape: f32[1,32], index: 10, kind: input, shape index: {}]
  %s11 = inlined_call_operand.hbm [shape: f32[16,32], index: 11, kind: output, shape index: {}]
  %s12 = sld [smem:[#allocation0]]
  $region54: #{propagator1.1} parent=0
    _
  %s14 = ssub.s32 1, %s12
  %s15 = scalar_select 0, %s14, %s12
  $region1: #{propagator1.1} parent=0
    #allocation2 [shape = 'u8[131072]{0}', space=vmem, size = 0x20000, scoped, tag = 'output window, operand 0, single buffered']
    #allocation3 [shape = 's32[1]{0}', space=sflag, size = 0x4, scoped, tag = 'scoped memory for propagator1.1']
    %16 = vsyncpa [#allocation3], 0
    // Predicated region
    $region2: #{propagator1.1} parent=1 // pred_check
      _
    $region3: #{propagator1.1} parent=1 // pred_check_branch
      %18 = sbr.rel (0) target = $region5
    $region4: #{propagator1.1} parent=1 // pred_region
      _
    $region5: #{propagator1.1} parent=1 // pred_fallthru
      _
    // Predicated region
    $region6: #{propagator1.1} parent=1 // pred_check
      _
    $region7: #{propagator1.1} parent=1 // pred_check_branch
      %20 = sbr.rel (0) target = $region9
    $region8: #{propagator1.1} parent=1 // pred_region
      _
    $region9: #{propagator1.1} parent=1 // pred_fallthru
      _
    // Predicated region
    $region10: #{propagator1.1} parent=1 // pred_check
      _
    $region11: #{propagator1.1} parent=1 // pred_check_branch
      %22 = sbr.rel (0) target = $region13
    $region12: #{propagator1.1} parent=1 // pred_region
      _
    $region13: #{propagator1.1} parent=1 // pred_fallthru
      _
    // Predicated region
    $region14: #{propagator1.1} parent=1 // pred_check
      _
    $region15: #{propagator1.1} parent=1 // pred_check_branch
      %24 = sbr.rel (0) target = $region17
    $region16: #{propagator1.1} parent=1 // pred_region
      _
    $region17: #{propagator1.1} parent=1 // pred_fallthru
      _
    // Predicated region
    $region18: #{propagator1.1} parent=1 // pred_check
      _
    $region19: #{propagator1.1} parent=1 // pred_check_branch
      %26 = sbr.rel (0) target = $region21
    $region20: #{propagator1.1} parent=1 // pred_region
      _
    $region21: #{propagator1.1} parent=1 // pred_fallthru
      _
    // Predicated region
    $region22: #{propagator1.1} parent=1 // pred_check
      _
    $region23: #{propagator1.1} parent=1 // pred_check_branch
      %28 = sbr.rel (0) target = $region25
    $region24: #{propagator1.1} parent=1 // pred_region
      _
    $region25: #{propagator1.1} parent=1 // pred_fallthru
      _
    // Predicated region
    $region26: #{propagator1.1} parent=1 // pred_check
      _
    $region27: #{propagator1.1} parent=1 // pred_check_branch
      %30 = sbr.rel (0) target = $region29
    $region28: #{propagator1.1} parent=1 // pred_region
      _
    $region29: #{propagator1.1} parent=1 // pred_fallthru
      _
    // Predicated region
    $region30: #{propagator1.1} parent=1 // pred_check
      _
    $region31: #{propagator1.1} parent=1 // pred_check_branch
      %32 = sbr.rel (0) target = $region33
    $region32: #{propagator1.1} parent=1 // pred_region
      _
    $region33: #{propagator1.1} parent=1 // pred_fallthru
      _
    // Predicated region
    $region34: #{propagator1.1} parent=1 // pred_check
      _
    $region35: #{propagator1.1} parent=1 // pred_check_branch
      %34 = sbr.rel (0) target = $region37
    $region36: #{propagator1.1} parent=1 // pred_region
      _
    $region37: #{propagator1.1} parent=1 // pred_fallthru
      _
    // Predicated region
    $region38: #{propagator1.1} parent=1 // pred_check
      _
    $region39: #{propagator1.1} parent=1 // pred_check_branch
      %36 = sbr.rel (0) target = $region41
    $region40: #{propagator1.1} parent=1 // pred_region
      _
    $region41: #{propagator1.1} parent=1 // pred_fallthru
      _
    // Predicated region
    $region42: #{propagator1.1} parent=1 // pred_check
      _
    $region43: #{propagator1.1} parent=1 // pred_check_branch
      %38 = sbr.rel (0) target = $region45
    $region44: #{propagator1.1} parent=1 // pred_region
      _
    $region45: #{propagator1.1} parent=1 // pred_fallthru
      _
    %v39 = vld [vmem:[%s0] sm:$0xff]
    %v40 = vld [vmem:[%s0 + $0x8] sm:$0xff]
    %v41 = vld [vmem:[%s0 + $0x10] sm:$0xff]
    %v42 = vld [vmem:[%s0 + $0x18] sm:$0xff]
    %v43 = vld [vmem:[%s0 + $0x20] sm:$0xff]
    %v44 = vld [vmem:[%s0 + $0x28] sm:$0xff]
    %v45 = vld [vmem:[%s0 + $0x30] sm:$0xff]
    %v46 = vld [vmem:[%s0 + $0x38] sm:$0xff]
    %v47 = vld [vmem:[%s0 + $0x40] sm:$0xff]
    %v48 = vld [vmem:[%s0 + $0x48] sm:$0xff]
    %v49 = vld [vmem:[%s0 + $0x50] sm:$0xff]
    %v50 = vld [vmem:[%s0 + $0x58] sm:$0xff]
    %v51 = vld [vmem:[%s0 + $0x60] sm:$0xff]
    %v52 = vld [vmem:[%s0 + $0x68] sm:$0xff]
    %v53 = vld [vmem:[%s0 + $0x70] sm:$0xff]
    %v54 = vld [vmem:[%s0 + $0x78] sm:$0xff]
    %v55 = vld [vmem:[%s0 + $0x80] sm:$0xff]
    %v56 = vld [vmem:[%s0 + $0x88] sm:$0xff]
    %v57 = vld [vmem:[%s0 + $0x90] sm:$0xff]
    %v58 = vld [vmem:[%s0 + $0x98] sm:$0xff]
    %v59 = vld [vmem:[%s0 + $0xa0] sm:$0xff]
    %v60 = vld [vmem:[%s0 + $0xa8] sm:$0xff]
    %v61 = vld [vmem:[%s0 + $0xb0] sm:$0xff]
    %v62 = vld [vmem:[%s0 + $0xb8] sm:$0xff]
    %v63 = vld [vmem:[%s0 + $0xc0] sm:$0xff]
    %v64 = vld [vmem:[%s0 + $0xc8] sm:$0xff]
    %v65 = vld [vmem:[%s0 + $0xd0] sm:$0xff]
    %v66 = vld [vmem:[%s0 + $0xd8] sm:$0xff]
    %v67 = vld [vmem:[%s0 + $0xe0] sm:$0xff]
    %v68 = vld [vmem:[%s0 + $0xe8] sm:$0xff]
    %v69 = vld [vmem:[%s0 + $0xf0] sm:$0xff]
    %v70 = vld [vmem:[%s0 + $0xf8] sm:$0xff]
    %v71 = vld [vmem:[%s1] sm:$0xff]
    %v72 = vld [vmem:[%s1 + $0x8] sm:$0xff]
    %v73 = vld [vmem:[%s1 + $0x10] sm:$0xff]
    %v74 = vld [vmem:[%s1 + $0x18] sm:$0xff]
    %v75 = vld [vmem:[%s1 + $0x20] sm:$0xff]
    %v76 = vld [vmem:[%s1 + $0x28] sm:$0xff]
    %v77 = vld [vmem:[%s1 + $0x30] sm:$0xff]
    %v78 = vld [vmem:[%s1 + $0x38] sm:$0xff]
    %v79 = vld [vmem:[%s1 + $0x40] sm:$0xff]
    %v80 = vld [vmem:[%s1 + $0x48] sm:$0xff]
    %v81 = vld [vmem:[%s1 + $0x50] sm:$0xff]
    %v82 = vld [vmem:[%s1 + $0x58] sm:$0xff]
    %v83 = vld [vmem:[%s1 + $0x60] sm:$0xff]
    %v84 = vld [vmem:[%s1 + $0x68] sm:$0xff]
    %v85 = vld [vmem:[%s1 + $0x70] sm:$0xff]
    %v86 = vld [vmem:[%s1 + $0x78] sm:$0xff]
    %v87 = vld [vmem:[%s1 + $0x80] sm:$0xff]
    %v88 = vld [vmem:[%s1 + $0x88] sm:$0xff]
    %v89 = vld [vmem:[%s1 + $0x90] sm:$0xff]
    %v90 = vld [vmem:[%s1 + $0x98] sm:$0xff]
    %v91 = vld [vmem:[%s1 + $0xa0] sm:$0xff]
    %v92 = vld [vmem:[%s1 + $0xa8] sm:$0xff]
    %v93 = vld [vmem:[%s1 + $0xb0] sm:$0xff]
    %v94 = vld [vmem:[%s1 + $0xb8] sm:$0xff]
    %v95 = vld [vmem:[%s1 + $0xc0] sm:$0xff]
    %v96 = vld [vmem:[%s1 + $0xc8] sm:$0xff]
    %v97 = vld [vmem:[%s1 + $0xd0] sm:$0xff]
    %v98 = vld [vmem:[%s1 + $0xd8] sm:$0xff]
    %v99 = vld [vmem:[%s1 + $0xe0] sm:$0xff]
    %v100 = vld [vmem:[%s1 + $0xe8] sm:$0xff]
    %v101 = vld [vmem:[%s1 + $0xf0] sm:$0xff]
    %v102 = vld [vmem:[%s1 + $0xf8] sm:$0xff]
    %v103 = vld [vmem:[%s2] sm:$0xff]
    %v104 = vld [vmem:[%s2 + $0x8] sm:$0xff]
    %v105 = vld [vmem:[%s2 + $0x10] sm:$0xff]
    %v106 = vld [vmem:[%s2 + $0x18] sm:$0xff]
    %v107 = vld [vmem:[%s2 + $0x20] sm:$0xff]
    %v108 = vld [vmem:[%s2 + $0x28] sm:$0xff]
    %v109 = vld [vmem:[%s2 + $0x30] sm:$0xff]
    %v110 = vld [vmem:[%s2 + $0x38] sm:$0xff]
    %v111 = vld [vmem:[%s3] sm:$0xff]
    %v112 = vld [vmem:[%s3 + $0x8] sm:$0xff]
    %v113 = vld [vmem:[%s3 + $0x10] sm:$0xff]
    %v114 = vld [vmem:[%s3 + $0x18] sm:$0xff]
    %vm115 = vcmask 261120
    %v117 = vsel %vm115, %v71, 0
    %v120 = vsel %vm115, %v72, 0
    %v123 = vsel %vm115, %v73, 0
    %v126 = vsel %vm115, %v74, 0
    %v129 = vsel %vm115, %v75, 0
    %v132 = vsel %vm115, %v76, 0
    %v135 = vsel %vm115, %v77, 0
    %v138 = vsel %vm115, %v78, 0
    %v141 = vsel %vm115, %v79, 0
    %v144 = vsel %vm115, %v80, 0
    %v147 = vsel %vm115, %v81, 0
    %v150 = vsel %vm115, %v82, 0
    %v153 = vsel %vm115, %v83, 0
    %v156 = vsel %vm115, %v84, 0
    %v159 = vsel %vm115, %v85, 0
    %v162 = vsel %vm115, %v86, 0
    %v165 = vsel %vm115, %v87, 0
    %v168 = vsel %vm115, %v88, 0
    %v171 = vsel %vm115, %v89, 0
    %v174 = vsel %vm115, %v90, 0
    %v177 = vsel %vm115, %v91, 0
    %v180 = vsel %vm115, %v92, 0
    %v183 = vsel %vm115, %v93, 0
    %v186 = vsel %vm115, %v94, 0
    %v189 = vsel %vm115, %v95, 0
    %v192 = vsel %vm115, %v96, 0
    %v195 = vsel %vm115, %v97, 0
    %v198 = vsel %vm115, %v98, 0
    %v201 = vsel %vm115, %v99, 0
    %v204 = vsel %vm115, %v100, 0
    %v207 = vsel %vm115, %v101, 0
    %v210 = vsel %vm115, %v102, 0
    %212 = vmatprep.subr.mxu0 0.0
    %213 = vmatpush1.msra.mxu0 0.0
    %214 = vmatprep.subr.mxu0 0.0
    %215 = vmatpush1.msra.mxu0 0.0
    %216 = vmatprep.subr.mxu0 0.0
    %217 = vmatpush1.msra.mxu0 0.0
    %218 = vmatprep.subr.mxu0 0.0
    %219 = vmatpush1.msra.mxu0 0.0
    %220 = vmatprep.subr.mxu0 0.0
    %221 = vmatpush1.msra.mxu0 0.0
    %222 = vmatprep.subr.mxu0 0.0
    %223 = vmatpush1.msra.mxu0 0.0
    %224 = vmatprep.subr.mxu0 0.0
    %225 = vmatpush1.msra.mxu0 0.0
    %226 = vmatprep.subr.mxu0 0.0
    %227 = vmatpush1.msra.mxu0 0.0
    %228 = vmatprep.subr.mxu0 0.0
    %229 = vmatpush1.msra.mxu0 0.0
    %230 = vmatprep.subr.mxu0 0.0
    %231 = vmatpush1.msra.mxu0 0.0
    %232 = vmatprep.subr.mxu0 0.0
    %233 = vmatpush1.msra.mxu0 0.0
    %234 = vmatprep.subr.mxu0 0.0
    %235 = vmatpush1.msra.mxu0 0.0
    %236 = vmatprep.subr.mxu0 0.0
    %237 = vmatpush1.msra.mxu0 %v114
    %238 = vmatprep.subr.mxu0 0.0
    %239 = vmatpush1.msra.mxu0 %v113
    %240 = vmatprep.subr.mxu0 0.0
    %241 = vmatpush1.msra.mxu0 %v112
    %242 = vmatprep.subr.mxu0 0.0
    %243 = vmatpush1.msra.mxu0 %v111
    %244 = vmatprep.subr.mxu0 0.0
    %245 = vmatpush2.msra.mxu0 0.0
    %246 = vmatprep.subr.mxu0 0.0
    %247 = vmatpush2.msra.mxu0 0.0
    %248 = vmatprep.subr.mxu0 0.0
    %249 = vmatpush2.msra.mxu0 0.0
    %250 = vmatprep.subr.mxu0 0.0
    %251 = vmatpush2.msra.mxu0 0.0
    %252 = vmatprep.subr.mxu0 0.0
    %253 = vmatpush2.msra.mxu0 0.0
    %254 = vmatprep.subr.mxu0 0.0
    %255 = vmatpush2.msra.mxu0 0.0
    %256 = vmatprep.subr.mxu0 0.0
    %257 = vmatpush2.msra.mxu0 0.0
    %258 = vmatprep.subr.mxu0 0.0
    %259 = vmatpush2.msra.mxu0 0.0
    %260 = vmatprep.subr.mxu0 0.0
    %261 = vmatpush2.msra.mxu0 0.0
    %262 = vmatprep.subr.mxu0 0.0
    %263 = vmatpush2.msra.mxu0 0.0
    %264 = vmatprep.subr.mxu0 0.0
    %265 = vmatpush2.msra.mxu0 0.0
    %266 = vmatprep.subr.mxu0 0.0
    %267 = vmatpush2.msra.mxu0 0.0
    %268 = vmatprep.subr.mxu0 0.0
    %269 = vmatpush2.msra.mxu0 0.0
    %270 = vmatprep.subr.mxu0 0.0
    %271 = vmatpush2.msra.mxu0 0.0
    %272 = vmatprep.subr.mxu0 0.0
    %273 = vmatpush2.msra.mxu0 0.0
    %274 = vmatprep.subr.mxu0 0.0
    %275 = vmatpush2.msra.mxu0 0.0
    %276 = vmatprep.mubr.f32.mxu0 0.0
    %277 = vmatmul.mubr.f32.gmra.mxu0 %v117
    %v278 = vpop.f32.mrf.mxu0
    %v279 = vadd.f32 0.0, %v278
    %v280 = vpop.f32.mrf.mxu0
    %281 = vmatprep.mubr.f32.mxu0 0.0
    %282 = vmatmul.mubr.f32.gmra.mxu0 %v120
    %v283 = vpop.f32.mrf.mxu0
    %v284 = vadd.f32 0.0, %v283
    %v285 = vpop.f32.mrf.mxu0
    %286 = vmatprep.mubr.f32.mxu0 0.0
    %287 = vmatmul.mubr.f32.gmra.mxu0 %v123
    %v288 = vpop.f32.mrf.mxu0
    %v289 = vadd.f32 0.0, %v288
    %v290 = vpop.f32.mrf.mxu0
    %291 = vmatprep.mubr.f32.mxu0 0.0
    %292 = vmatmul.mubr.f32.gmra.mxu0 %v126
    %v293 = vpop.f32.mrf.mxu0
    %v294 = vadd.f32 0.0, %v293
    %v295 = vpop.f32.mrf.mxu0
    %296 = vmatprep.mubr.f32.mxu0 0.0
    %297 = vmatmul.mubr.f32.gmra.mxu0 %v129
    %v298 = vpop.f32.mrf.mxu0
    %v299 = vadd.f32 0.0, %v298
    %v300 = vpop.f32.mrf.mxu0
    %301 = vmatprep.mubr.f32.mxu0 0.0
    %302 = vmatmul.mubr.f32.gmra.mxu0 %v132
    %v303 = vpop.f32.mrf.mxu0
    %v304 = vadd.f32 0.0, %v303
    %v305 = vpop.f32.mrf.mxu0
    %306 = vmatprep.mubr.f32.mxu0 0.0
    %307 = vmatmul.mubr.f32.gmra.mxu0 %v135
    %v308 = vpop.f32.mrf.mxu0
    %v309 = vadd.f32 0.0, %v308
    %v310 = vpop.f32.mrf.mxu0
    %311 = vmatprep.mubr.f32.mxu0 0.0
    %312 = vmatmul.mubr.f32.gmra.mxu0 %v138
    %v313 = vpop.f32.mrf.mxu0
    %v314 = vadd.f32 0.0, %v313
    %v315 = vpop.f32.mrf.mxu0
    %316 = vmatprep.mubr.f32.mxu0 0.0
    %317 = vmatmul.mubr.f32.gmra.mxu0 %v141
    %v318 = vpop.f32.mrf.mxu0
    %v319 = vadd.f32 0.0, %v318
    %v320 = vpop.f32.mrf.mxu0
    %321 = vmatprep.mubr.f32.mxu0 0.0
    %322 = vmatmul.mubr.f32.gmra.mxu0 %v144
    %v323 = vpop.f32.mrf.mxu0
    %v324 = vadd.f32 0.0, %v323
    %v325 = vpop.f32.mrf.mxu0
    %326 = vmatprep.mubr.f32.mxu0 0.0
    %327 = vmatmul.mubr.f32.gmra.mxu0 %v147
    %v328 = vpop.f32.mrf.mxu0
    %v329 = vadd.f32 0.0, %v328
    %v330 = vpop.f32.mrf.mxu0
    %331 = vmatprep.mubr.f32.mxu0 0.0
    %332 = vmatmul.mubr.f32.gmra.mxu0 %v150
    %v333 = vpop.f32.mrf.mxu0
    %v334 = vadd.f32 0.0, %v333
    %v335 = vpop.f32.mrf.mxu0
    %336 = vmatprep.mubr.f32.mxu0 0.0
    %337 = vmatmul.mubr.f32.gmra.mxu0 %v153
    %v338 = vpop.f32.mrf.mxu0
    %v339 = vadd.f32 0.0, %v338
    %v340 = vpop.f32.mrf.mxu0
    %341 = vmatprep.mubr.f32.mxu0 0.0
    %342 = vmatmul.mubr.f32.gmra.mxu0 %v156
    %v343 = vpop.f32.mrf.mxu0
    %v344 = vadd.f32 0.0, %v343
    %v345 = vpop.f32.mrf.mxu0
    %346 = vmatprep.mubr.f32.mxu0 0.0
    %347 = vmatmul.mubr.f32.gmra.mxu0 %v159
    %v348 = vpop.f32.mrf.mxu0
    %v349 = vadd.f32 0.0, %v348
    %v350 = vpop.f32.mrf.mxu0
    %351 = vmatprep.mubr.f32.mxu0 0.0
    %352 = vmatmul.mubr.f32.gmra.mxu0 %v162
    %v353 = vpop.f32.mrf.mxu0
    %v354 = vadd.f32 0.0, %v353
    %v355 = vpop.f32.mrf.mxu0
    %356 = vmatprep.mubr.f32.mxu0 0.0
    %357 = vmatmul.mubr.f32.gmra.mxu0 %v165
    %v358 = vpop.f32.mrf.mxu0
    %v359 = vadd.f32 0.0, %v358
    %v360 = vpop.f32.mrf.mxu0
    %361 = vmatprep.mubr.f32.mxu0 0.0
    %362 = vmatmul.mubr.f32.gmra.mxu0 %v168
    %v363 = vpop.f32.mrf.mxu0
    %v364 = vadd.f32 0.0, %v363
    %v365 = vpop.f32.mrf.mxu0
    %366 = vmatprep.mubr.f32.mxu0 0.0
    %367 = vmatmul.mubr.f32.gmra.mxu0 %v171
    %v368 = vpop.f32.mrf.mxu0
    %v369 = vadd.f32 0.0, %v368
    %v370 = vpop.f32.mrf.mxu0
    %371 = vmatprep.mubr.f32.mxu0 0.0
    %372 = vmatmul.mubr.f32.gmra.mxu0 %v174
    %v373 = vpop.f32.mrf.mxu0
    %v374 = vadd.f32 0.0, %v373
    %v375 = vpop.f32.mrf.mxu0
    %376 = vmatprep.mubr.f32.mxu0 0.0
    %377 = vmatmul.mubr.f32.gmra.mxu0 %v177
    %v378 = vpop.f32.mrf.mxu0
    %v379 = vadd.f32 0.0, %v378
    %v380 = vpop.f32.mrf.mxu0
    %381 = vmatprep.mubr.f32.mxu0 0.0
    %382 = vmatmul.mubr.f32.gmra.mxu0 %v180
    %v383 = vpop.f32.mrf.mxu0
    %v384 = vadd.f32 0.0, %v383
    %v385 = vpop.f32.mrf.mxu0
    %386 = vmatprep.mubr.f32.mxu0 0.0
    %387 = vmatmul.mubr.f32.gmra.mxu0 %v183
    %v388 = vpop.f32.mrf.mxu0
    %v389 = vadd.f32 0.0, %v388
    %v390 = vpop.f32.mrf.mxu0
    %391 = vmatprep.mubr.f32.mxu0 0.0
    %392 = vmatmul.mubr.f32.gmra.mxu0 %v186
    %v393 = vpop.f32.mrf.mxu0
    %v394 = vadd.f32 0.0, %v393
    %v395 = vpop.f32.mrf.mxu0
    %396 = vmatprep.mubr.f32.mxu0 0.0
    %397 = vmatmul.mubr.f32.gmra.mxu0 %v189
    %v398 = vpop.f32.mrf.mxu0
    %v399 = vadd.f32 0.0, %v398
    %v400 = vpop.f32.mrf.mxu0
    %401 = vmatprep.mubr.f32.mxu0 0.0
    %402 = vmatmul.mubr.f32.gmra.mxu0 %v192
    %v403 = vpop.f32.mrf.mxu0
    %v404 = vadd.f32 0.0, %v403
    %v405 = vpop.f32.mrf.mxu0
    %406 = vmatprep.mubr.f32.mxu0 0.0
    %407 = vmatmul.mubr.f32.gmra.mxu0 %v195
    %v408 = vpop.f32.mrf.mxu0
    %v409 = vadd.f32 0.0, %v408
    %v410 = vpop.f32.mrf.mxu0
    %411 = vmatprep.mubr.f32.mxu0 0.0
    %412 = vmatmul.mubr.f32.gmra.mxu0 %v198
    %v413 = vpop.f32.mrf.mxu0
    %v414 = vadd.f32 0.0, %v413
    %v415 = vpop.f32.mrf.mxu0
    %416 = vmatprep.mubr.f32.mxu0 0.0
    %417 = vmatmul.mubr.f32.gmra.mxu0 %v201
    %v418 = vpop.f32.mrf.mxu0
    %v419 = vadd.f32 0.0, %v418
    %v420 = vpop.f32.mrf.mxu0
    %421 = vmatprep.mubr.f32.mxu0 0.0
    %422 = vmatmul.mubr.f32.gmra.mxu0 %v204
    %v423 = vpop.f32.mrf.mxu0
    %v424 = vadd.f32 0.0, %v423
    %v425 = vpop.f32.mrf.mxu0
    %426 = vmatprep.mubr.f32.mxu0 0.0
    %427 = vmatmul.mubr.f32.gmra.mxu0 %v207
    %v428 = vpop.f32.mrf.mxu0
    %v429 = vadd.f32 0.0, %v428
    %v430 = vpop.f32.mrf.mxu0
    %431 = vmatprep.mubr.f32.mxu0 0.0
    %432 = vmatmul.mubr.f32.gmra.mxu0 %v210
    %v433 = vpop.f32.mrf.mxu0
    %v434 = vadd.f32 0.0, %v433
    %v435 = vpop.f32.mrf.mxu0
    %436 = vdwg.mxu0
    %vm437 = vcmask 523264
    %v439 = vsel %vm437, %v39, 0
    %v442 = vsel %vm437, %v40, 0
    %v445 = vsel %vm437, %v41, 0
    %v448 = vsel %vm437, %v42, 0
    %v451 = vsel %vm437, %v43, 0
    %v454 = vsel %vm437, %v44, 0
    %v457 = vsel %vm437, %v45, 0
    %v460 = vsel %vm437, %v46, 0
    %v463 = vsel %vm437, %v47, 0
    %v466 = vsel %vm437, %v48, 0
    %v469 = vsel %vm437, %v49, 0
    %v472 = vsel %vm437, %v50, 0
    %v475 = vsel %vm437, %v51, 0
    %v478 = vsel %vm437, %v52, 0
    %v481 = vsel %vm437, %v53, 0
    %v484 = vsel %vm437, %v54, 0
    %v487 = vsel %vm437, %v55, 0
    %v490 = vsel %vm437, %v56, 0
    %v493 = vsel %vm437, %v57, 0
    %v496 = vsel %vm437, %v58, 0
    %v499 = vsel %vm437, %v59, 0
    %v502 = vsel %vm437, %v60, 0
    %v505 = vsel %vm437, %v61, 0
    %v508 = vsel %vm437, %v62, 0
    %v511 = vsel %vm437, %v63, 0
    %v514 = vsel %vm437, %v64, 0
    %v517 = vsel %vm437, %v65, 0
    %v520 = vsel %vm437, %v66, 0
    %v523 = vsel %vm437, %v67, 0
    %v526 = vsel %vm437, %v68, 0
    %v529 = vsel %vm437, %v69, 0
    %v532 = vsel %vm437, %v70, 0
    %534 = vmatprep.subr.mxu0 0.0
    %535 = vmatpush1.msra.mxu0 0.0
    %536 = vmatprep.subr.mxu0 0.0
    %537 = vmatpush1.msra.mxu0 0.0
    %538 = vmatprep.subr.mxu0 0.0
    %539 = vmatpush1.msra.mxu0 0.0
    %540 = vmatprep.subr.mxu0 0.0
    %541 = vmatpush1.msra.mxu0 0.0
    %542 = vmatprep.subr.mxu0 0.0
    %543 = vmatpush1.msra.mxu0 0.0
    %544 = vmatprep.subr.mxu0 0.0
    %545 = vmatpush1.msra.mxu0 0.0
    %546 = vmatprep.subr.mxu0 0.0
    %547 = vmatpush1.msra.mxu0 0.0
    %548 = vmatprep.subr.mxu0 0.0
    %549 = vmatpush1.msra.mxu0 0.0
    %550 = vmatprep.subr.mxu0 0.0
    %551 = vmatpush1.msra.mxu0 %v110
    %552 = vmatprep.subr.mxu0 0.0
    %553 = vmatpush1.msra.mxu0 %v109
    %554 = vmatprep.subr.mxu0 0.0
    %555 = vmatpush1.msra.mxu0 %v108
    %556 = vmatprep.subr.mxu0 0.0
    %557 = vmatpush1.msra.mxu0 %v107
    %558 = vmatprep.subr.mxu0 0.0
    %559 = vmatpush1.msra.mxu0 %v106
    %560 = vmatprep.subr.mxu0 0.0
    %561 = vmatpush1.msra.mxu0 %v105
    %562 = vmatprep.subr.mxu0 0.0
    %563 = vmatpush1.msra.mxu0 %v104
    %564 = vmatprep.subr.mxu0 0.0
    %565 = vmatpush1.msra.mxu0 %v103
    %566 = vmatprep.subr.mxu0 0.0
    %567 = vmatpush2.msra.mxu0 0.0
    %568 = vmatprep.subr.mxu0 0.0
    %569 = vmatpush2.msra.mxu0 0.0
    %570 = vmatprep.subr.mxu0 0.0
    %571 = vmatpush2.msra.mxu0 0.0
    %572 = vmatprep.subr.mxu0 0.0
    %573 = vmatpush2.msra.mxu0 0.0
    %574 = vmatprep.subr.mxu0 0.0
    %575 = vmatpush2.msra.mxu0 0.0
    %576 = vmatprep.subr.mxu0 0.0
    %577 = vmatpush2.msra.mxu0 0.0
    %578 = vmatprep.subr.mxu0 0.0
    %579 = vmatpush2.msra.mxu0 0.0
    %580 = vmatprep.subr.mxu0 0.0
    %581 = vmatpush2.msra.mxu0 0.0
    %582 = vmatprep.subr.mxu0 0.0
    %583 = vmatpush2.msra.mxu0 0.0
    %584 = vmatprep.subr.mxu0 0.0
    %585 = vmatpush2.msra.mxu0 0.0
    %586 = vmatprep.subr.mxu0 0.0
    %587 = vmatpush2.msra.mxu0 0.0
    %588 = vmatprep.subr.mxu0 0.0
    %589 = vmatpush2.msra.mxu0 0.0
    %590 = vmatprep.subr.mxu0 0.0
    %591 = vmatpush2.msra.mxu0 0.0
    %592 = vmatprep.subr.mxu0 0.0
    %593 = vmatpush2.msra.mxu0 0.0
    %594 = vmatprep.subr.mxu0 0.0
    %595 = vmatpush2.msra.mxu0 0.0
    %596 = vmatprep.subr.mxu0 0.0
    %597 = vmatpush2.msra.mxu0 0.0
    %598 = vmatprep.mubr.f32.mxu0 0.0
    %599 = vmatmul.mubr.f32.gmra.mxu0 %v439
    %v600 = vpop.f32.mrf.mxu0
    %v601 = vadd.f32 %v279, %v600
    %v602 = vpop.f32.mrf.mxu0
    %603 = vmatprep.mubr.f32.mxu0 0.0
    %604 = vmatmul.mubr.f32.gmra.mxu0 %v442
    %v605 = vpop.f32.mrf.mxu0
    %v606 = vadd.f32 %v284, %v605
    %v607 = vpop.f32.mrf.mxu0
    %608 = vmatprep.mubr.f32.mxu0 0.0
    %609 = vmatmul.mubr.f32.gmra.mxu0 %v445
    %v610 = vpop.f32.mrf.mxu0
    %v611 = vadd.f32 %v289, %v610
    %v612 = vpop.f32.mrf.mxu0
    %613 = vmatprep.mubr.f32.mxu0 0.0
    %614 = vmatmul.mubr.f32.gmra.mxu0 %v448
    %v615 = vpop.f32.mrf.mxu0
    %v616 = vadd.f32 %v294, %v615
    %v617 = vpop.f32.mrf.mxu0
    %618 = vmatprep.mubr.f32.mxu0 0.0
    %619 = vmatmul.mubr.f32.gmra.mxu0 %v451
    %v620 = vpop.f32.mrf.mxu0
    %v621 = vadd.f32 %v299, %v620
    %v622 = vpop.f32.mrf.mxu0
    %623 = vmatprep.mubr.f32.mxu0 0.0
    %624 = vmatmul.mubr.f32.gmra.mxu0 %v454
    %v625 = vpop.f32.mrf.mxu0
    %v626 = vadd.f32 %v304, %v625
    %v627 = vpop.f32.mrf.mxu0
    %628 = vmatprep.mubr.f32.mxu0 0.0
    %629 = vmatmul.mubr.f32.gmra.mxu0 %v457
    %v630 = vpop.f32.mrf.mxu0
    %v631 = vadd.f32 %v309, %v630
    %v632 = vpop.f32.mrf.mxu0
    %633 = vmatprep.mubr.f32.mxu0 0.0
    %634 = vmatmul.mubr.f32.gmra.mxu0 %v460
    %v635 = vpop.f32.mrf.mxu0
    %v636 = vadd.f32 %v314, %v635
    %v637 = vpop.f32.mrf.mxu0
    %638 = vmatprep.mubr.f32.mxu0 0.0
    %639 = vmatmul.mubr.f32.gmra.mxu0 %v463
    %v640 = vpop.f32.mrf.mxu0
    %v641 = vadd.f32 %v319, %v640
    %v642 = vpop.f32.mrf.mxu0
    %643 = vmatprep.mubr.f32.mxu0 0.0
    %644 = vmatmul.mubr.f32.gmra.mxu0 %v466
    %v645 = vpop.f32.mrf.mxu0
    %v646 = vadd.f32 %v324, %v645
    %v647 = vpop.f32.mrf.mxu0
    %648 = vmatprep.mubr.f32.mxu0 0.0
    %649 = vmatmul.mubr.f32.gmra.mxu0 %v469
    %v650 = vpop.f32.mrf.mxu0
    %v651 = vadd.f32 %v329, %v650
    %v652 = vpop.f32.mrf.mxu0
    %653 = vmatprep.mubr.f32.mxu0 0.0
    %654 = vmatmul.mubr.f32.gmra.mxu0 %v472
    %v655 = vpop.f32.mrf.mxu0
    %v656 = vadd.f32 %v334, %v655
    %v657 = vpop.f32.mrf.mxu0
    %658 = vmatprep.mubr.f32.mxu0 0.0
    %659 = vmatmul.mubr.f32.gmra.mxu0 %v475
    %v660 = vpop.f32.mrf.mxu0
    %v661 = vadd.f32 %v339, %v660
    %v662 = vpop.f32.mrf.mxu0
    %663 = vmatprep.mubr.f32.mxu0 0.0
    %664 = vmatmul.mubr.f32.gmra.mxu0 %v478
    %v665 = vpop.f32.mrf.mxu0
    %v666 = vadd.f32 %v344, %v665
    %v667 = vpop.f32.mrf.mxu0
    %668 = vmatprep.mubr.f32.mxu0 0.0
    %669 = vmatmul.mubr.f32.gmra.mxu0 %v481
    %v670 = vpop.f32.mrf.mxu0
    %v671 = vadd.f32 %v349, %v670
    %v672 = vpop.f32.mrf.mxu0
    %673 = vmatprep.mubr.f32.mxu0 0.0
    %674 = vmatmul.mubr.f32.gmra.mxu0 %v484
    %v675 = vpop.f32.mrf.mxu0
    %v676 = vadd.f32 %v354, %v675
    %v677 = vpop.f32.mrf.mxu0
    %678 = vmatprep.mubr.f32.mxu0 0.0
    %679 = vmatmul.mubr.f32.gmra.mxu0 %v487
    %v680 = vpop.f32.mrf.mxu0
    %v681 = vadd.f32 %v359, %v680
    %v682 = vpop.f32.mrf.mxu0
    %683 = vmatprep.mubr.f32.mxu0 0.0
    %684 = vmatmul.mubr.f32.gmra.mxu0 %v490
    %v685 = vpop.f32.mrf.mxu0
    %v686 = vadd.f32 %v364, %v685
    %v687 = vpop.f32.mrf.mxu0
    %688 = vmatprep.mubr.f32.mxu0 0.0
    %689 = vmatmul.mubr.f32.gmra.mxu0 %v493
    %v690 = vpop.f32.mrf.mxu0
    %v691 = vadd.f32 %v369, %v690
    %v692 = vpop.f32.mrf.mxu0
    %693 = vmatprep.mubr.f32.mxu0 0.0
    %694 = vmatmul.mubr.f32.gmra.mxu0 %v496
    %v695 = vpop.f32.mrf.mxu0
    %v696 = vadd.f32 %v374, %v695
    %v697 = vpop.f32.mrf.mxu0
    %698 = vmatprep.mubr.f32.mxu0 0.0
    %699 = vmatmul.mubr.f32.gmra.mxu0 %v499
    %v700 = vpop.f32.mrf.mxu0
    %v701 = vadd.f32 %v379, %v700
    %v702 = vpop.f32.mrf.mxu0
    %703 = vmatprep.mubr.f32.mxu0 0.0
    %704 = vmatmul.mubr.f32.gmra.mxu0 %v502
    %v705 = vpop.f32.mrf.mxu0
    %v706 = vadd.f32 %v384, %v705
    %v707 = vpop.f32.mrf.mxu0
    %708 = vmatprep.mubr.f32.mxu0 0.0
    %709 = vmatmul.mubr.f32.gmra.mxu0 %v505
    %v710 = vpop.f32.mrf.mxu0
    %v711 = vadd.f32 %v389, %v710
    %v712 = vpop.f32.mrf.mxu0
    %713 = vmatprep.mubr.f32.mxu0 0.0
    %714 = vmatmul.mubr.f32.gmra.mxu0 %v508
    %v715 = vpop.f32.mrf.mxu0
    %v716 = vadd.f32 %v394, %v715
    %v717 = vpop.f32.mrf.mxu0
    %718 = vmatprep.mubr.f32.mxu0 0.0
    %719 = vmatmul.mubr.f32.gmra.mxu0 %v511
    %v720 = vpop.f32.mrf.mxu0
    %v721 = vadd.f32 %v399, %v720
    %v722 = vpop.f32.mrf.mxu0
    %723 = vmatprep.mubr.f32.mxu0 0.0
    %724 = vmatmul.mubr.f32.gmra.mxu0 %v514
    %v725 = vpop.f32.mrf.mxu0
    %v726 = vadd.f32 %v404, %v725
    %v727 = vpop.f32.mrf.mxu0
    %728 = vmatprep.mubr.f32.mxu0 0.0
    %729 = vmatmul.mubr.f32.gmra.mxu0 %v517
    %v730 = vpop.f32.mrf.mxu0
    %v731 = vadd.f32 %v409, %v730
    %v732 = vpop.f32.mrf.mxu0
    %733 = vmatprep.mubr.f32.mxu0 0.0
    %734 = vmatmul.mubr.f32.gmra.mxu0 %v520
    %v735 = vpop.f32.mrf.mxu0
    %v736 = vadd.f32 %v414, %v735
    %v737 = vpop.f32.mrf.mxu0
    %738 = vmatprep.mubr.f32.mxu0 0.0
    %739 = vmatmul.mubr.f32.gmra.mxu0 %v523
    %v740 = vpop.f32.mrf.mxu0
    %v741 = vadd.f32 %v419, %v740
    %v742 = vpop.f32.mrf.mxu0
    %743 = vmatprep.mubr.f32.mxu0 0.0
    %744 = vmatmul.mubr.f32.gmra.mxu0 %v526
    %v745 = vpop.f32.mrf.mxu0
    %v746 = vadd.f32 %v424, %v745
    %v747 = vpop.f32.mrf.mxu0
    %748 = vmatprep.mubr.f32.mxu0 0.0
    %749 = vmatmul.mubr.f32.gmra.mxu0 %v529
    %v750 = vpop.f32.mrf.mxu0
    %v751 = vadd.f32 %v429, %v750
    %v752 = vpop.f32.mrf.mxu0
    %753 = vmatprep.mubr.f32.mxu0 0.0
    %754 = vmatmul.mubr.f32.gmra.mxu0 %v532
    %v755 = vpop.f32.mrf.mxu0
    %v756 = vadd.f32 %v434, %v755
    %v757 = vpop.f32.mrf.mxu0
    %758 = vdwg.mxu0
    %v759 = vld [vmem:[%s8] sm:$0x1]
    %v761 = vlaneseq
    %v762 = vshrl.u32 %v761, 7
    %v763 = vsub.s32 0, %v762
    %v764 = vrot.slane %v759, %v763
    %v766 = vadd.f32 %v601, %v764
    %v767 = vadd.f32 %v606, %v764
    %v768 = vadd.f32 %v611, %v764
    %v769 = vadd.f32 %v616, %v764
    %v770 = vadd.f32 %v621, %v764
    %v771 = vadd.f32 %v626, %v764
    %v772 = vadd.f32 %v631, %v764
    %v773 = vadd.f32 %v636, %v764
    %v774 = vadd.f32 %v641, %v764
    %v775 = vadd.f32 %v646, %v764
    %v776 = vadd.f32 %v651, %v764
    %v777 = vadd.f32 %v656, %v764
    %v778 = vadd.f32 %v661, %v764
    %v779 = vadd.f32 %v666, %v764
    %v780 = vadd.f32 %v671, %v764
    %v781 = vadd.f32 %v676, %v764
    %v782 = vadd.f32 %v681, %v764
    %v783 = vadd.f32 %v686, %v764
    %v784 = vadd.f32 %v691, %v764
    %v785 = vadd.f32 %v696, %v764
    %v786 = vadd.f32 %v701, %v764
    %v787 = vadd.f32 %v706, %v764
    %v788 = vadd.f32 %v711, %v764
    %v789 = vadd.f32 %v716, %v764
    %v790 = vadd.f32 %v721, %v764
    %v791 = vadd.f32 %v726, %v764
    %v792 = vadd.f32 %v731, %v764
    %v793 = vadd.f32 %v736, %v764
    %v794 = vadd.f32 %v741, %v764
    %v795 = vadd.f32 %v746, %v764
    %v796 = vadd.f32 %v751, %v764
    %v797 = vadd.f32 %v756, %v764
    %v798 = vxor.u32 %v766, 2147483648
    %v799 = vxor.u32 %v767, 2147483648
    %v800 = vxor.u32 %v768, 2147483648
    %v801 = vxor.u32 %v769, 2147483648
    %v802 = vxor.u32 %v770, 2147483648
    %v803 = vxor.u32 %v771, 2147483648
    %v804 = vxor.u32 %v772, 2147483648
    %v805 = vxor.u32 %v773, 2147483648
    %v806 = vxor.u32 %v774, 2147483648
    %v807 = vxor.u32 %v775, 2147483648
    %v808 = vxor.u32 %v776, 2147483648
    %v809 = vxor.u32 %v777, 2147483648
    %v810 = vxor.u32 %v778, 2147483648
    %v811 = vxor.u32 %v779, 2147483648
    %v812 = vxor.u32 %v780, 2147483648
    %v813 = vxor.u32 %v781, 2147483648
    %v814 = vxor.u32 %v782, 2147483648
    %v815 = vxor.u32 %v783, 2147483648
    %v816 = vxor.u32 %v784, 2147483648
    %v817 = vxor.u32 %v785, 2147483648
    %v818 = vxor.u32 %v786, 2147483648
    %v819 = vxor.u32 %v787, 2147483648
    %v820 = vxor.u32 %v788, 2147483648
    %v821 = vxor.u32 %v789, 2147483648
    %v822 = vxor.u32 %v790, 2147483648
    %v823 = vxor.u32 %v791, 2147483648
    %v824 = vxor.u32 %v792, 2147483648
    %v825 = vxor.u32 %v793, 2147483648
    %v826 = vxor.u32 %v794, 2147483648
    %v827 = vxor.u32 %v795, 2147483648
    %v828 = vxor.u32 %v796, 2147483648
    %v829 = vxor.u32 %v797, 2147483648
    %v830 = vmul.f32 %v798, 1.442695
    %v831 = vpow.pop %v830
    %v832 = vmul.f32 %v799, 1.442695
    %v833 = vpow.pop %v832
    %v834 = vmul.f32 %v800, 1.442695
    %v835 = vpow.pop %v834
    %v836 = vmul.f32 %v801, 1.442695
    %v837 = vpow.pop %v836
    %v838 = vmul.f32 %v802, 1.442695
    %v839 = vpow.pop %v838
    %v840 = vmul.f32 %v803, 1.442695
    %v841 = vpow.pop %v840
    %v842 = vmul.f32 %v804, 1.442695
    %v843 = vpow.pop %v842
    %v844 = vmul.f32 %v805, 1.442695
    %v845 = vpow.pop %v844
    %v846 = vmul.f32 %v806, 1.442695
    %v847 = vpow.pop %v846
    %v848 = vmul.f32 %v807, 1.442695
    %v849 = vpow.pop %v848
    %v850 = vmul.f32 %v808, 1.442695
    %v851 = vpow.pop %v850
    %v852 = vmul.f32 %v809, 1.442695
    %v853 = vpow.pop %v852
    %v854 = vmul.f32 %v810, 1.442695
    %v855 = vpow.pop %v854
    %v856 = vmul.f32 %v811, 1.442695
    %v857 = vpow.pop %v856
    %v858 = vmul.f32 %v812, 1.442695
    %v859 = vpow.pop %v858
    %v860 = vmul.f32 %v813, 1.442695
    %v861 = vpow.pop %v860
    %v862 = vmul.f32 %v814, 1.442695
    %v863 = vpow.pop %v862
    %v864 = vmul.f32 %v815, 1.442695
    %v865 = vpow.pop %v864
    %v866 = vmul.f32 %v816, 1.442695
    %v867 = vpow.pop %v866
    %v868 = vmul.f32 %v817, 1.442695
    %v869 = vpow.pop %v868
    %v870 = vmul.f32 %v818, 1.442695
    %v871 = vpow.pop %v870
    %v872 = vmul.f32 %v819, 1.442695
    %v873 = vpow.pop %v872
    %v874 = vmul.f32 %v820, 1.442695
    %v875 = vpow.pop %v874
    %v876 = vmul.f32 %v821, 1.442695
    %v877 = vpow.pop %v876
    %v878 = vmul.f32 %v822, 1.442695
    %v879 = vpow.pop %v878
    %v880 = vmul.f32 %v823, 1.442695
    %v881 = vpow.pop %v880
    %v882 = vmul.f32 %v824, 1.442695
    %v883 = vpow.pop %v882
    %v884 = vmul.f32 %v825, 1.442695
    %v885 = vpow.pop %v884
    %v886 = vmul.f32 %v826, 1.442695
    %v887 = vpow.pop %v886
    %v888 = vmul.f32 %v827, 1.442695
    %v889 = vpow.pop %v888
    %v890 = vmul.f32 %v828, 1.442695
    %v891 = vpow.pop %v890
    %v892 = vmul.f32 %v829, 1.442695
    %v893 = vpow.pop %v892
    %v894 = vadd.f32 %v831, 1.0
    %v895 = vadd.f32 %v833, 1.0
    %v896 = vadd.f32 %v835, 1.0
    %v897 = vadd.f32 %v837, 1.0
    %v898 = vadd.f32 %v839, 1.0
    %v899 = vadd.f32 %v841, 1.0
    %v900 = vadd.f32 %v843, 1.0
    %v901 = vadd.f32 %v845, 1.0
    %v902 = vadd.f32 %v847, 1.0
    %v903 = vadd.f32 %v849, 1.0
    %v904 = vadd.f32 %v851, 1.0
    %v905 = vadd.f32 %v853, 1.0
    %v906 = vadd.f32 %v855, 1.0
    %v907 = vadd.f32 %v857, 1.0
    %v908 = vadd.f32 %v859, 1.0
    %v909 = vadd.f32 %v861, 1.0
    %v910 = vadd.f32 %v863, 1.0
    %v911 = vadd.f32 %v865, 1.0
    %v912 = vadd.f32 %v867, 1.0
    %v913 = vadd.f32 %v869, 1.0
    %v914 = vadd.f32 %v871, 1.0
    %v915 = vadd.f32 %v873, 1.0
    %v916 = vadd.f32 %v875, 1.0
    %v917 = vadd.f32 %v877, 1.0
    %v918 = vadd.f32 %v879, 1.0
    %v919 = vadd.f32 %v881, 1.0
    %v920 = vadd.f32 %v883, 1.0
    %v921 = vadd.f32 %v885, 1.0
    %v922 = vadd.f32 %v887, 1.0
    %v923 = vadd.f32 %v889, 1.0
    %v924 = vadd.f32 %v891, 1.0
    %v925 = vadd.f32 %v893, 1.0
    %v926 = vrcp.pop %v894
    %v927 = vmul.f32 1.0, %v926
    %v928 = vrcp.pop %v895
    %v929 = vmul.f32 1.0, %v928
    %v930 = vrcp.pop %v896
    %v931 = vmul.f32 1.0, %v930
    %v932 = vrcp.pop %v897
    %v933 = vmul.f32 1.0, %v932
    %v934 = vrcp.pop %v898
    %v935 = vmul.f32 1.0, %v934
    %v936 = vrcp.pop %v899
    %v937 = vmul.f32 1.0, %v936
    %v938 = vrcp.pop %v900
    %v939 = vmul.f32 1.0, %v938
    %v940 = vrcp.pop %v901
    %v941 = vmul.f32 1.0, %v940
    %v942 = vrcp.pop %v902
    %v943 = vmul.f32 1.0, %v942
    %v944 = vrcp.pop %v903
    %v945 = vmul.f32 1.0, %v944
    %v946 = vrcp.pop %v904
    %v947 = vmul.f32 1.0, %v946
    %v948 = vrcp.pop %v905
    %v949 = vmul.f32 1.0, %v948
    %v950 = vrcp.pop %v906
    %v951 = vmul.f32 1.0, %v950
    %v952 = vrcp.pop %v907
    %v953 = vmul.f32 1.0, %v952
    %v954 = vrcp.pop %v908
    %v955 = vmul.f32 1.0, %v954
    %v956 = vrcp.pop %v909
    %v957 = vmul.f32 1.0, %v956
    %v958 = vrcp.pop %v910
    %v959 = vmul.f32 1.0, %v958
    %v960 = vrcp.pop %v911
    %v961 = vmul.f32 1.0, %v960
    %v962 = vrcp.pop %v912
    %v963 = vmul.f32 1.0, %v962
    %v964 = vrcp.pop %v913
    %v965 = vmul.f32 1.0, %v964
    %v966 = vrcp.pop %v914
    %v967 = vmul.f32 1.0, %v966
    %v968 = vrcp.pop %v915
    %v969 = vmul.f32 1.0, %v968
    %v970 = vrcp.pop %v916
    %v971 = vmul.f32 1.0, %v970
    %v972 = vrcp.pop %v917
    %v973 = vmul.f32 1.0, %v972
    %v974 = vrcp.pop %v918
    %v975 = vmul.f32 1.0, %v974
    %v976 = vrcp.pop %v919
    %v977 = vmul.f32 1.0, %v976
    %v978 = vrcp.pop %v920
    %v979 = vmul.f32 1.0, %v978
    %v980 = vrcp.pop %v921
    %v981 = vmul.f32 1.0, %v980
    %v982 = vrcp.pop %v922
    %v983 = vmul.f32 1.0, %v982
    %v984 = vrcp.pop %v923
    %v985 = vmul.f32 1.0, %v984
    %v986 = vrcp.pop %v924
    %v987 = vmul.f32 1.0, %v986
    %v988 = vrcp.pop %v925
    %v989 = vmul.f32 1.0, %v988
    %v990 = vld [vmem:[%s4] sm:$0xff]
    %v991 = vld [vmem:[%s4 + $0x8] sm:$0xff]
    %v992 = vld [vmem:[%s4 + $0x10] sm:$0xff]
    %v993 = vld [vmem:[%s4 + $0x18] sm:$0xff]
    %v994 = vld [vmem:[%s4 + $0x20] sm:$0xff]
    %v995 = vld [vmem:[%s4 + $0x28] sm:$0xff]
    %v996 = vld [vmem:[%s4 + $0x30] sm:$0xff]
    %v997 = vld [vmem:[%s4 + $0x38] sm:$0xff]
    %v998 = vld [vmem:[%s5] sm:$0xff]
    %v999 = vld [vmem:[%s5 + $0x8] sm:$0xff]
    %v1000 = vld [vmem:[%s5 + $0x10] sm:$0xff]
    %v1001 = vld [vmem:[%s5 + $0x18] sm:$0xff]
    %1002 = vmatprep.subr.mxu0 0.0
    %1003 = vmatpush1.msra.mxu0 0.0
    %1004 = vmatprep.subr.mxu0 0.0
    %1005 = vmatpush1.msra.mxu0 0.0
    %1006 = vmatprep.subr.mxu0 0.0
    %1007 = vmatpush1.msra.mxu0 0.0
    %1008 = vmatprep.subr.mxu0 0.0
    %1009 = vmatpush1.msra.mxu0 0.0
    %1010 = vmatprep.subr.mxu0 0.0
    %1011 = vmatpush1.msra.mxu0 0.0
    %1012 = vmatprep.subr.mxu0 0.0
    %1013 = vmatpush1.msra.mxu0 0.0
    %1014 = vmatprep.subr.mxu0 0.0
    %1015 = vmatpush1.msra.mxu0 0.0
    %1016 = vmatprep.subr.mxu0 0.0
    %1017 = vmatpush1.msra.mxu0 0.0
    %1018 = vmatprep.subr.mxu0 0.0
    %1019 = vmatpush1.msra.mxu0 0.0
    %1020 = vmatprep.subr.mxu0 0.0
    %1021 = vmatpush1.msra.mxu0 0.0
    %1022 = vmatprep.subr.mxu0 0.0
    %1023 = vmatpush1.msra.mxu0 0.0
    %1024 = vmatprep.subr.mxu0 0.0
    %1025 = vmatpush1.msra.mxu0 0.0
    %1026 = vmatprep.subr.mxu0 0.0
    %1027 = vmatpush1.msra.mxu0 %v1001
    %1028 = vmatprep.subr.mxu0 0.0
    %1029 = vmatpush1.msra.mxu0 %v1000
    %1030 = vmatprep.subr.mxu0 0.0
    %1031 = vmatpush1.msra.mxu0 %v999
    %1032 = vmatprep.subr.mxu0 0.0
    %1033 = vmatpush1.msra.mxu0 %v998
    %1034 = vmatprep.subr.mxu0 0.0
    %1035 = vmatpush2.msra.mxu0 0.0
    %1036 = vmatprep.subr.mxu0 0.0
    %1037 = vmatpush2.msra.mxu0 0.0
    %1038 = vmatprep.subr.mxu0 0.0
    %1039 = vmatpush2.msra.mxu0 0.0
    %1040 = vmatprep.subr.mxu0 0.0
    %1041 = vmatpush2.msra.mxu0 0.0
    %1042 = vmatprep.subr.mxu0 0.0
    %1043 = vmatpush2.msra.mxu0 0.0
    %1044 = vmatprep.subr.mxu0 0.0
    %1045 = vmatpush2.msra.mxu0 0.0
    %1046 = vmatprep.subr.mxu0 0.0
    %1047 = vmatpush2.msra.mxu0 0.0
    %1048 = vmatprep.subr.mxu0 0.0
    %1049 = vmatpush2.msra.mxu0 0.0
    %1050 = vmatprep.subr.mxu0 0.0
    %1051 = vmatpush2.msra.mxu0 0.0
    %1052 = vmatprep.subr.mxu0 0.0
    %1053 = vmatpush2.msra.mxu0 0.0
    %1054 = vmatprep.subr.mxu0 0.0
    %1055 = vmatpush2.msra.mxu0 0.0
    %1056 = vmatprep.subr.mxu0 0.0
    %1057 = vmatpush2.msra.mxu0 0.0
    %1058 = vmatprep.subr.mxu0 0.0
    %1059 = vmatpush2.msra.mxu0 0.0
    %1060 = vmatprep.subr.mxu0 0.0
    %1061 = vmatpush2.msra.mxu0 0.0
    %1062 = vmatprep.subr.mxu0 0.0
    %1063 = vmatpush2.msra.mxu0 0.0
    %1064 = vmatprep.subr.mxu0 0.0
    %1065 = vmatpush2.msra.mxu0 0.0
    %1066 = vmatprep.mubr.f32.mxu0 0.0
    %1067 = vmatmul.mubr.f32.gmra.mxu0 %v117
    %v1068 = vpop.f32.mrf.mxu0
    %v1069 = vadd.f32 0.0, %v1068
    %v1070 = vpop.f32.mrf.mxu0
    %1071 = vmatprep.mubr.f32.mxu0 0.0
    %1072 = vmatmul.mubr.f32.gmra.mxu0 %v120
    %v1073 = vpop.f32.mrf.mxu0
    %v1074 = vadd.f32 0.0, %v1073
    %v1075 = vpop.f32.mrf.mxu0
    %1076 = vmatprep.mubr.f32.mxu0 0.0
    %1077 = vmatmul.mubr.f32.gmra.mxu0 %v123
    %v1078 = vpop.f32.mrf.mxu0
    %v1079 = vadd.f32 0.0, %v1078
    %v1080 = vpop.f32.mrf.mxu0
    %1081 = vmatprep.mubr.f32.mxu0 0.0
    %1082 = vmatmul.mubr.f32.gmra.mxu0 %v126
    %v1083 = vpop.f32.mrf.mxu0
    %v1084 = vadd.f32 0.0, %v1083
    %v1085 = vpop.f32.mrf.mxu0
    %1086 = vmatprep.mubr.f32.mxu0 0.0
    %1087 = vmatmul.mubr.f32.gmra.mxu0 %v129
    %v1088 = vpop.f32.mrf.mxu0
    %v1089 = vadd.f32 0.0, %v1088
    %v1090 = vpop.f32.mrf.mxu0
    %1091 = vmatprep.mubr.f32.mxu0 0.0
    %1092 = vmatmul.mubr.f32.gmra.mxu0 %v132
    %v1093 = vpop.f32.mrf.mxu0
    %v1094 = vadd.f32 0.0, %v1093
    %v1095 = vpop.f32.mrf.mxu0
    %1096 = vmatprep.mubr.f32.mxu0 0.0
    %1097 = vmatmul.mubr.f32.gmra.mxu0 %v135
    %v1098 = vpop.f32.mrf.mxu0
    %v1099 = vadd.f32 0.0, %v1098
    %v1100 = vpop.f32.mrf.mxu0
    %1101 = vmatprep.mubr.f32.mxu0 0.0
    %1102 = vmatmul.mubr.f32.gmra.mxu0 %v138
    %v1103 = vpop.f32.mrf.mxu0
    %v1104 = vadd.f32 0.0, %v1103
    %v1105 = vpop.f32.mrf.mxu0
    %1106 = vmatprep.mubr.f32.mxu0 0.0
    %1107 = vmatmul.mubr.f32.gmra.mxu0 %v141
    %v1108 = vpop.f32.mrf.mxu0
    %v1109 = vadd.f32 0.0, %v1108
    %v1110 = vpop.f32.mrf.mxu0
    %1111 = vmatprep.mubr.f32.mxu0 0.0
    %1112 = vmatmul.mubr.f32.gmra.mxu0 %v144
    %v1113 = vpop.f32.mrf.mxu0
    %v1114 = vadd.f32 0.0, %v1113
    %v1115 = vpop.f32.mrf.mxu0
    %1116 = vmatprep.mubr.f32.mxu0 0.0
    %1117 = vmatmul.mubr.f32.gmra.mxu0 %v147
    %v1118 = vpop.f32.mrf.mxu0
    %v1119 = vadd.f32 0.0, %v1118
    %v1120 = vpop.f32.mrf.mxu0
    %1121 = vmatprep.mubr.f32.mxu0 0.0
    %1122 = vmatmul.mubr.f32.gmra.mxu0 %v150
    %v1123 = vpop.f32.mrf.mxu0
    %v1124 = vadd.f32 0.0, %v1123
    %v1125 = vpop.f32.mrf.mxu0
    %1126 = vmatprep.mubr.f32.mxu0 0.0
    %1127 = vmatmul.mubr.f32.gmra.mxu0 %v153
    %v1128 = vpop.f32.mrf.mxu0
    %v1129 = vadd.f32 0.0, %v1128
    %v1130 = vpop.f32.mrf.mxu0
    %1131 = vmatprep.mubr.f32.mxu0 0.0
    %1132 = vmatmul.mubr.f32.gmra.mxu0 %v156
    %v1133 = vpop.f32.mrf.mxu0
    %v1134 = vadd.f32 0.0, %v1133
    %v1135 = vpop.f32.mrf.mxu0
    %1136 = vmatprep.mubr.f32.mxu0 0.0
    %1137 = vmatmul.mubr.f32.gmra.mxu0 %v159
    %v1138 = vpop.f32.mrf.mxu0
    %v1139 = vadd.f32 0.0, %v1138
    %v1140 = vpop.f32.mrf.mxu0
    %1141 = vmatprep.mubr.f32.mxu0 0.0
    %1142 = vmatmul.mubr.f32.gmra.mxu0 %v162
    %v1143 = vpop.f32.mrf.mxu0
    %v1144 = vadd.f32 0.0, %v1143
    %v1145 = vpop.f32.mrf.mxu0
    %1146 = vmatprep.mubr.f32.mxu0 0.0
    %1147 = vmatmul.mubr.f32.gmra.mxu0 %v165
    %v1148 = vpop.f32.mrf.mxu0
    %v1149 = vadd.f32 0.0, %v1148
    %v1150 = vpop.f32.mrf.mxu0
    %1151 = vmatprep.mubr.f32.mxu0 0.0
    %1152 = vmatmul.mubr.f32.gmra.mxu0 %v168
    %v1153 = vpop.f32.mrf.mxu0
    %v1154 = vadd.f32 0.0, %v1153
    %v1155 = vpop.f32.mrf.mxu0
    %1156 = vmatprep.mubr.f32.mxu0 0.0
    %1157 = vmatmul.mubr.f32.gmra.mxu0 %v171
    %v1158 = vpop.f32.mrf.mxu0
    %v1159 = vadd.f32 0.0, %v1158
    %v1160 = vpop.f32.mrf.mxu0
    %1161 = vmatprep.mubr.f32.mxu0 0.0
    %1162 = vmatmul.mubr.f32.gmra.mxu0 %v174
    %v1163 = vpop.f32.mrf.mxu0
    %v1164 = vadd.f32 0.0, %v1163
    %v1165 = vpop.f32.mrf.mxu0
    %1166 = vmatprep.mubr.f32.mxu0 0.0
    %1167 = vmatmul.mubr.f32.gmra.mxu0 %v177
    %v1168 = vpop.f32.mrf.mxu0
    %v1169 = vadd.f32 0.0, %v1168
    %v1170 = vpop.f32.mrf.mxu0
    %1171 = vmatprep.mubr.f32.mxu0 0.0
    %1172 = vmatmul.mubr.f32.gmra.mxu0 %v180
    %v1173 = vpop.f32.mrf.mxu0
    %v1174 = vadd.f32 0.0, %v1173
    %v1175 = vpop.f32.mrf.mxu0
    %1176 = vmatprep.mubr.f32.mxu0 0.0
    %1177 = vmatmul.mubr.f32.gmra.mxu0 %v183
    %v1178 = vpop.f32.mrf.mxu0
    %v1179 = vadd.f32 0.0, %v1178
    %v1180 = vpop.f32.mrf.mxu0
    %1181 = vmatprep.mubr.f32.mxu0 0.0
    %1182 = vmatmul.mubr.f32.gmra.mxu0 %v186
    %v1183 = vpop.f32.mrf.mxu0
    %v1184 = vadd.f32 0.0, %v1183
    %v1185 = vpop.f32.mrf.mxu0
    %1186 = vmatprep.mubr.f32.mxu0 0.0
    %1187 = vmatmul.mubr.f32.gmra.mxu0 %v189
    %v1188 = vpop.f32.mrf.mxu0
    %v1189 = vadd.f32 0.0, %v1188
    %v1190 = vpop.f32.mrf.mxu0
    %1191 = vmatprep.mubr.f32.mxu0 0.0
    %1192 = vmatmul.mubr.f32.gmra.mxu0 %v192
    %v1193 = vpop.f32.mrf.mxu0
    %v1194 = vadd.f32 0.0, %v1193
    %v1195 = vpop.f32.mrf.mxu0
    %1196 = vmatprep.mubr.f32.mxu0 0.0
    %1197 = vmatmul.mubr.f32.gmra.mxu0 %v195
    %v1198 = vpop.f32.mrf.mxu0
    %v1199 = vadd.f32 0.0, %v1198
    %v1200 = vpop.f32.mrf.mxu0
    %1201 = vmatprep.mubr.f32.mxu0 0.0
    %1202 = vmatmul.mubr.f32.gmra.mxu0 %v198
    %v1203 = vpop.f32.mrf.mxu0
    %v1204 = vadd.f32 0.0, %v1203
    %v1205 = vpop.f32.mrf.mxu0
    %1206 = vmatprep.mubr.f32.mxu0 0.0
    %1207 = vmatmul.mubr.f32.gmra.mxu0 %v201
    %v1208 = vpop.f32.mrf.mxu0
    %v1209 = vadd.f32 0.0, %v1208
    %v1210 = vpop.f32.mrf.mxu0
    %1211 = vmatprep.mubr.f32.mxu0 0.0
    %1212 = vmatmul.mubr.f32.gmra.mxu0 %v204
    %v1213 = vpop.f32.mrf.mxu0
    %v1214 = vadd.f32 0.0, %v1213
    %v1215 = vpop.f32.mrf.mxu0
    %1216 = vmatprep.mubr.f32.mxu0 0.0
    %1217 = vmatmul.mubr.f32.gmra.mxu0 %v207
    %v1218 = vpop.f32.mrf.mxu0
    %v1219 = vadd.f32 0.0, %v1218
    %v1220 = vpop.f32.mrf.mxu0
    %1221 = vmatprep.mubr.f32.mxu0 0.0
    %1222 = vmatmul.mubr.f32.gmra.mxu0 %v210
    %v1223 = vpop.f32.mrf.mxu0
    %v1224 = vadd.f32 0.0, %v1223
    %v1225 = vpop.f32.mrf.mxu0
    %1226 = vdwg.mxu0
    %1227 = vmatprep.subr.mxu0 0.0
    %1228 = vmatpush1.msra.mxu0 0.0
    %1229 = vmatprep.subr.mxu0 0.0
    %1230 = vmatpush1.msra.mxu0 0.0
    %1231 = vmatprep.subr.mxu0 0.0
    %1232 = vmatpush1.msra.mxu0 0.0
    %1233 = vmatprep.subr.mxu0 0.0
    %1234 = vmatpush1.msra.mxu0 0.0
    %1235 = vmatprep.subr.mxu0 0.0
    %1236 = vmatpush1.msra.mxu0 0.0
    %1237 = vmatprep.subr.mxu0 0.0
    %1238 = vmatpush1.msra.mxu0 0.0
    %1239 = vmatprep.subr.mxu0 0.0
    %1240 = vmatpush1.msra.mxu0 0.0
    %1241 = vmatprep.subr.mxu0 0.0
    %1242 = vmatpush1.msra.mxu0 0.0
    %1243 = vmatprep.subr.mxu0 0.0
    %1244 = vmatpush1.msra.mxu0 %v997
    %1245 = vmatprep.subr.mxu0 0.0
    %1246 = vmatpush1.msra.mxu0 %v996
    %1247 = vmatprep.subr.mxu0 0.0
    %1248 = vmatpush1.msra.mxu0 %v995
    %1249 = vmatprep.subr.mxu0 0.0
    %1250 = vmatpush1.msra.mxu0 %v994
    %1251 = vmatprep.subr.mxu0 0.0
    %1252 = vmatpush1.msra.mxu0 %v993
    %1253 = vmatprep.subr.mxu0 0.0
    %1254 = vmatpush1.msra.mxu0 %v992
    %1255 = vmatprep.subr.mxu0 0.0
    %1256 = vmatpush1.msra.mxu0 %v991
    %1257 = vmatprep.subr.mxu0 0.0
    %1258 = vmatpush1.msra.mxu0 %v990
    %1259 = vmatprep.subr.mxu0 0.0
    %1260 = vmatpush2.msra.mxu0 0.0
    %1261 = vmatprep.subr.mxu0 0.0
    %1262 = vmatpush2.msra.mxu0 0.0
    %1263 = vmatprep.subr.mxu0 0.0
    %1264 = vmatpush2.msra.mxu0 0.0
    %1265 = vmatprep.subr.mxu0 0.0
    %1266 = vmatpush2.msra.mxu0 0.0
    %1267 = vmatprep.subr.mxu0 0.0
    %1268 = vmatpush2.msra.mxu0 0.0
    %1269 = vmatprep.subr.mxu0 0.0
    %1270 = vmatpush2.msra.mxu0 0.0
    %1271 = vmatprep.subr.mxu0 0.0
    %1272 = vmatpush2.msra.mxu0 0.0
    %1273 = vmatprep.subr.mxu0 0.0
    %1274 = vmatpush2.msra.mxu0 0.0
    %1275 = vmatprep.subr.mxu0 0.0
    %1276 = vmatpush2.msra.mxu0 0.0
    %1277 = vmatprep.subr.mxu0 0.0
    %1278 = vmatpush2.msra.mxu0 0.0
    %1279 = vmatprep.subr.mxu0 0.0
    %1280 = vmatpush2.msra.mxu0 0.0
    %1281 = vmatprep.subr.mxu0 0.0
    %1282 = vmatpush2.msra.mxu0 0.0
    %1283 = vmatprep.subr.mxu0 0.0
    %1284 = vmatpush2.msra.mxu0 0.0
    %1285 = vmatprep.subr.mxu0 0.0
    %1286 = vmatpush2.msra.mxu0 0.0
    %1287 = vmatprep.subr.mxu0 0.0
    %1288 = vmatpush2.msra.mxu0 0.0
    %1289 = vmatprep.subr.mxu0 0.0
    %1290 = vmatpush2.msra.mxu0 0.0
    %1291 = vmatprep.mubr.f32.mxu0 0.0
    %1292 = vmatmul.mubr.f32.gmra.mxu0 %v439
    %v1293 = vpop.f32.mrf.mxu0
    %v1294 = vadd.f32 %v1069, %v1293
    %v1295 = vpop.f32.mrf.mxu0
    %1296 = vmatprep.mubr.f32.mxu0 0.0
    %1297 = vmatmul.mubr.f32.gmra.mxu0 %v442
    %v1298 = vpop.f32.mrf.mxu0
    %v1299 = vadd.f32 %v1074, %v1298
    %v1300 = vpop.f32.mrf.mxu0
    %1301 = vmatprep.mubr.f32.mxu0 0.0
    %1302 = vmatmul.mubr.f32.gmra.mxu0 %v445
    %v1303 = vpop.f32.mrf.mxu0
    %v1304 = vadd.f32 %v1079, %v1303
    %v1305 = vpop.f32.mrf.mxu0
    %1306 = vmatprep.mubr.f32.mxu0 0.0
    %1307 = vmatmul.mubr.f32.gmra.mxu0 %v448
    %v1308 = vpop.f32.mrf.mxu0
    %v1309 = vadd.f32 %v1084, %v1308
    %v1310 = vpop.f32.mrf.mxu0
    %1311 = vmatprep.mubr.f32.mxu0 0.0
    %1312 = vmatmul.mubr.f32.gmra.mxu0 %v451
    %v1313 = vpop.f32.mrf.mxu0
    %v1314 = vadd.f32 %v1089, %v1313
    %v1315 = vpop.f32.mrf.mxu0
    %1316 = vmatprep.mubr.f32.mxu0 0.0
    %1317 = vmatmul.mubr.f32.gmra.mxu0 %v454
    %v1318 = vpop.f32.mrf.mxu0
    %v1319 = vadd.f32 %v1094, %v1318
    %v1320 = vpop.f32.mrf.mxu0
    %1321 = vmatprep.mubr.f32.mxu0 0.0
    %1322 = vmatmul.mubr.f32.gmra.mxu0 %v457
    %v1323 = vpop.f32.mrf.mxu0
    %v1324 = vadd.f32 %v1099, %v1323
    %v1325 = vpop.f32.mrf.mxu0
    %1326 = vmatprep.mubr.f32.mxu0 0.0
    %1327 = vmatmul.mubr.f32.gmra.mxu0 %v460
    %v1328 = vpop.f32.mrf.mxu0
    %v1329 = vadd.f32 %v1104, %v1328
    %v1330 = vpop.f32.mrf.mxu0
    %1331 = vmatprep.mubr.f32.mxu0 0.0
    %1332 = vmatmul.mubr.f32.gmra.mxu0 %v463
    %v1333 = vpop.f32.mrf.mxu0
    %v1334 = vadd.f32 %v1109, %v1333
    %v1335 = vpop.f32.mrf.mxu0
    %1336 = vmatprep.mubr.f32.mxu0 0.0
    %1337 = vmatmul.mubr.f32.gmra.mxu0 %v466
    %v1338 = vpop.f32.mrf.mxu0
    %v1339 = vadd.f32 %v1114, %v1338
    %v1340 = vpop.f32.mrf.mxu0
    %1341 = vmatprep.mubr.f32.mxu0 0.0
    %1342 = vmatmul.mubr.f32.gmra.mxu0 %v469
    %v1343 = vpop.f32.mrf.mxu0
    %v1344 = vadd.f32 %v1119, %v1343
    %v1345 = vpop.f32.mrf.mxu0
    %1346 = vmatprep.mubr.f32.mxu0 0.0
    %1347 = vmatmul.mubr.f32.gmra.mxu0 %v472
    %v1348 = vpop.f32.mrf.mxu0
    %v1349 = vadd.f32 %v1124, %v1348
    %v1350 = vpop.f32.mrf.mxu0
    %1351 = vmatprep.mubr.f32.mxu0 0.0
    %1352 = vmatmul.mubr.f32.gmra.mxu0 %v475
    %v1353 = vpop.f32.mrf.mxu0
    %v1354 = vadd.f32 %v1129, %v1353
    %v1355 = vpop.f32.mrf.mxu0
    %1356 = vmatprep.mubr.f32.mxu0 0.0
    %1357 = vmatmul.mubr.f32.gmra.mxu0 %v478
    %v1358 = vpop.f32.mrf.mxu0
    %v1359 = vadd.f32 %v1134, %v1358
    %v1360 = vpop.f32.mrf.mxu0
    %1361 = vmatprep.mubr.f32.mxu0 0.0
    %1362 = vmatmul.mubr.f32.gmra.mxu0 %v481
    %v1363 = vpop.f32.mrf.mxu0
    %v1364 = vadd.f32 %v1139, %v1363
    %v1365 = vpop.f32.mrf.mxu0
    %1366 = vmatprep.mubr.f32.mxu0 0.0
    %1367 = vmatmul.mubr.f32.gmra.mxu0 %v484
    %v1368 = vpop.f32.mrf.mxu0
    %v1369 = vadd.f32 %v1144, %v1368
    %v1370 = vpop.f32.mrf.mxu0
    %1371 = vmatprep.mubr.f32.mxu0 0.0
    %1372 = vmatmul.mubr.f32.gmra.mxu0 %v487
    %v1373 = vpop.f32.mrf.mxu0
    %v1374 = vadd.f32 %v1149, %v1373
    %v1375 = vpop.f32.mrf.mxu0
    %1376 = vmatprep.mubr.f32.mxu0 0.0
    %1377 = vmatmul.mubr.f32.gmra.mxu0 %v490
    %v1378 = vpop.f32.mrf.mxu0
    %v1379 = vadd.f32 %v1154, %v1378
    %v1380 = vpop.f32.mrf.mxu0
    %1381 = vmatprep.mubr.f32.mxu0 0.0
    %1382 = vmatmul.mubr.f32.gmra.mxu0 %v493
    %v1383 = vpop.f32.mrf.mxu0
    %v1384 = vadd.f32 %v1159, %v1383
    %v1385 = vpop.f32.mrf.mxu0
    %1386 = vmatprep.mubr.f32.mxu0 0.0
    %1387 = vmatmul.mubr.f32.gmra.mxu0 %v496
    %v1388 = vpop.f32.mrf.mxu0
    %v1389 = vadd.f32 %v1164, %v1388
    %v1390 = vpop.f32.mrf.mxu0
    %1391 = vmatprep.mubr.f32.mxu0 0.0
    %1392 = vmatmul.mubr.f32.gmra.mxu0 %v499
    %v1393 = vpop.f32.mrf.mxu0
    %v1394 = vadd.f32 %v1169, %v1393
    %v1395 = vpop.f32.mrf.mxu0
    %1396 = vmatprep.mubr.f32.mxu0 0.0
    %1397 = vmatmul.mubr.f32.gmra.mxu0 %v502
    %v1398 = vpop.f32.mrf.mxu0
    %v1399 = vadd.f32 %v1174, %v1398
    %v1400 = vpop.f32.mrf.mxu0
    %1401 = vmatprep.mubr.f32.mxu0 0.0
    %1402 = vmatmul.mubr.f32.gmra.mxu0 %v505
    %v1403 = vpop.f32.mrf.mxu0
    %v1404 = vadd.f32 %v1179, %v1403
    %v1405 = vpop.f32.mrf.mxu0
    %1406 = vmatprep.mubr.f32.mxu0 0.0
    %1407 = vmatmul.mubr.f32.gmra.mxu0 %v508
    %v1408 = vpop.f32.mrf.mxu0
    %v1409 = vadd.f32 %v1184, %v1408
    %v1410 = vpop.f32.mrf.mxu0
    %1411 = vmatprep.mubr.f32.mxu0 0.0
    %1412 = vmatmul.mubr.f32.gmra.mxu0 %v511
    %v1413 = vpop.f32.mrf.mxu0
    %v1414 = vadd.f32 %v1189, %v1413
    %v1415 = vpop.f32.mrf.mxu0
    %1416 = vmatprep.mubr.f32.mxu0 0.0
    %1417 = vmatmul.mubr.f32.gmra.mxu0 %v514
    %v1418 = vpop.f32.mrf.mxu0
    %v1419 = vadd.f32 %v1194, %v1418
    %v1420 = vpop.f32.mrf.mxu0
    %1421 = vmatprep.mubr.f32.mxu0 0.0
    %1422 = vmatmul.mubr.f32.gmra.mxu0 %v517
    %v1423 = vpop.f32.mrf.mxu0
    %v1424 = vadd.f32 %v1199, %v1423
    %v1425 = vpop.f32.mrf.mxu0
    %1426 = vmatprep.mubr.f32.mxu0 0.0
    %1427 = vmatmul.mubr.f32.gmra.mxu0 %v520
    %v1428 = vpop.f32.mrf.mxu0
    %v1429 = vadd.f32 %v1204, %v1428
    %v1430 = vpop.f32.mrf.mxu0
    %1431 = vmatprep.mubr.f32.mxu0 0.0
    %1432 = vmatmul.mubr.f32.gmra.mxu0 %v523
    %v1433 = vpop.f32.mrf.mxu0
    %v1434 = vadd.f32 %v1209, %v1433
    %v1435 = vpop.f32.mrf.mxu0
    %1436 = vmatprep.mubr.f32.mxu0 0.0
    %1437 = vmatmul.mubr.f32.gmra.mxu0 %v526
    %v1438 = vpop.f32.mrf.mxu0
    %v1439 = vadd.f32 %v1214, %v1438
    %v1440 = vpop.f32.mrf.mxu0
    %1441 = vmatprep.mubr.f32.mxu0 0.0
    %1442 = vmatmul.mubr.f32.gmra.mxu0 %v529
    %v1443 = vpop.f32.mrf.mxu0
    %v1444 = vadd.f32 %v1219, %v1443
    %v1445 = vpop.f32.mrf.mxu0
    %1446 = vmatprep.mubr.f32.mxu0 0.0
    %1447 = vmatmul.mubr.f32.gmra.mxu0 %v532
    %v1448 = vpop.f32.mrf.mxu0
    %v1449 = vadd.f32 %v1224, %v1448
    %v1450 = vpop.f32.mrf.mxu0
    %1451 = vdwg.mxu0
    %v1452 = vld [vmem:[%s9] sm:$0x1]
    %v1454 = vlaneseq
    %v1455 = vshrl.u32 %v1454, 7
    %v1456 = vsub.s32 0, %v1455
    %v1457 = vrot.slane %v1452, %v1456
    %v1459 = vadd.f32 %v1294, %v1457
    %v1460 = vadd.f32 %v1299, %v1457
    %v1461 = vadd.f32 %v1304, %v1457
    %v1462 = vadd.f32 %v1309, %v1457
    %v1463 = vadd.f32 %v1314, %v1457
    %v1464 = vadd.f32 %v1319, %v1457
    %v1465 = vadd.f32 %v1324, %v1457
    %v1466 = vadd.f32 %v1329, %v1457
    %v1467 = vadd.f32 %v1334, %v1457
    %v1468 = vadd.f32 %v1339, %v1457
    %v1469 = vadd.f32 %v1344, %v1457
    %v1470 = vadd.f32 %v1349, %v1457
    %v1471 = vadd.f32 %v1354, %v1457
    %v1472 = vadd.f32 %v1359, %v1457
    %v1473 = vadd.f32 %v1364, %v1457
    %v1474 = vadd.f32 %v1369, %v1457
    %v1475 = vadd.f32 %v1374, %v1457
    %v1476 = vadd.f32 %v1379, %v1457
    %v1477 = vadd.f32 %v1384, %v1457
    %v1478 = vadd.f32 %v1389, %v1457
    %v1479 = vadd.f32 %v1394, %v1457
    %v1480 = vadd.f32 %v1399, %v1457
    %v1481 = vadd.f32 %v1404, %v1457
    %v1482 = vadd.f32 %v1409, %v1457
    %v1483 = vadd.f32 %v1414, %v1457
    %v1484 = vadd.f32 %v1419, %v1457
    %v1485 = vadd.f32 %v1424, %v1457
    %v1486 = vadd.f32 %v1429, %v1457
    %v1487 = vadd.f32 %v1434, %v1457
    %v1488 = vadd.f32 %v1439, %v1457
    %v1489 = vadd.f32 %v1444, %v1457
    %v1490 = vadd.f32 %v1449, %v1457
    %v1491 = vxor.u32 %v1459, 2147483648
    %v1492 = vxor.u32 %v1460, 2147483648
    %v1493 = vxor.u32 %v1461, 2147483648
    %v1494 = vxor.u32 %v1462, 2147483648
    %v1495 = vxor.u32 %v1463, 2147483648
    %v1496 = vxor.u32 %v1464, 2147483648
    %v1497 = vxor.u32 %v1465, 2147483648
    %v1498 = vxor.u32 %v1466, 2147483648
    %v1499 = vxor.u32 %v1467, 2147483648
    %v1500 = vxor.u32 %v1468, 2147483648
    %v1501 = vxor.u32 %v1469, 2147483648
    %v1502 = vxor.u32 %v1470, 2147483648
    %v1503 = vxor.u32 %v1471, 2147483648
    %v1504 = vxor.u32 %v1472, 2147483648
    %v1505 = vxor.u32 %v1473, 2147483648
    %v1506 = vxor.u32 %v1474, 2147483648
    %v1507 = vxor.u32 %v1475, 2147483648
    %v1508 = vxor.u32 %v1476, 2147483648
    %v1509 = vxor.u32 %v1477, 2147483648
    %v1510 = vxor.u32 %v1478, 2147483648
    %v1511 = vxor.u32 %v1479, 2147483648
    %v1512 = vxor.u32 %v1480, 2147483648
    %v1513 = vxor.u32 %v1481, 2147483648
    %v1514 = vxor.u32 %v1482, 2147483648
    %v1515 = vxor.u32 %v1483, 2147483648
    %v1516 = vxor.u32 %v1484, 2147483648
    %v1517 = vxor.u32 %v1485, 2147483648
    %v1518 = vxor.u32 %v1486, 2147483648
    %v1519 = vxor.u32 %v1487, 2147483648
    %v1520 = vxor.u32 %v1488, 2147483648
    %v1521 = vxor.u32 %v1489, 2147483648
    %v1522 = vxor.u32 %v1490, 2147483648
    %v1523 = vmul.f32 %v1491, 1.442695
    %v1524 = vpow.pop %v1523
    %v1525 = vmul.f32 %v1492, 1.442695
    %v1526 = vpow.pop %v1525
    %v1527 = vmul.f32 %v1493, 1.442695
    %v1528 = vpow.pop %v1527
    %v1529 = vmul.f32 %v1494, 1.442695
    %v1530 = vpow.pop %v1529
    %v1531 = vmul.f32 %v1495, 1.442695
    %v1532 = vpow.pop %v1531
    %v1533 = vmul.f32 %v1496, 1.442695
    %v1534 = vpow.pop %v1533
    %v1535 = vmul.f32 %v1497, 1.442695
    %v1536 = vpow.pop %v1535
    %v1537 = vmul.f32 %v1498, 1.442695
    %v1538 = vpow.pop %v1537
    %v1539 = vmul.f32 %v1499, 1.442695
    %v1540 = vpow.pop %v1539
    %v1541 = vmul.f32 %v1500, 1.442695
    %v1542 = vpow.pop %v1541
    %v1543 = vmul.f32 %v1501, 1.442695
    %v1544 = vpow.pop %v1543
    %v1545 = vmul.f32 %v1502, 1.442695
    %v1546 = vpow.pop %v1545
    %v1547 = vmul.f32 %v1503, 1.442695
    %v1548 = vpow.pop %v1547
    %v1549 = vmul.f32 %v1504, 1.442695
    %v1550 = vpow.pop %v1549
    %v1551 = vmul.f32 %v1505, 1.442695
    %v1552 = vpow.pop %v1551
    %v1553 = vmul.f32 %v1506, 1.442695
    %v1554 = vpow.pop %v1553
    %v1555 = vmul.f32 %v1507, 1.442695
    %v1556 = vpow.pop %v1555
    %v1557 = vmul.f32 %v1508, 1.442695
    %v1558 = vpow.pop %v1557
    %v1559 = vmul.f32 %v1509, 1.442695
    %v1560 = vpow.pop %v1559
    %v1561 = vmul.f32 %v1510, 1.442695
    %v1562 = vpow.pop %v1561
    %v1563 = vmul.f32 %v1511, 1.442695
    %v1564 = vpow.pop %v1563
    %v1565 = vmul.f32 %v1512, 1.442695
    %v1566 = vpow.pop %v1565
    %v1567 = vmul.f32 %v1513, 1.442695
    %v1568 = vpow.pop %v1567
    %v1569 = vmul.f32 %v1514, 1.442695
    %v1570 = vpow.pop %v1569
    %v1571 = vmul.f32 %v1515, 1.442695
    %v1572 = vpow.pop %v1571
    %v1573 = vmul.f32 %v1516, 1.442695
    %v1574 = vpow.pop %v1573
    %v1575 = vmul.f32 %v1517, 1.442695
    %v1576 = vpow.pop %v1575
    %v1577 = vmul.f32 %v1518, 1.442695
    %v1578 = vpow.pop %v1577
    %v1579 = vmul.f32 %v1519, 1.442695
    %v1580 = vpow.pop %v1579
    %v1581 = vmul.f32 %v1520, 1.442695
    %v1582 = vpow.pop %v1581
    %v1583 = vmul.f32 %v1521, 1.442695
    %v1584 = vpow.pop %v1583
    %v1585 = vmul.f32 %v1522, 1.442695
    %v1586 = vpow.pop %v1585
    %v1587 = vadd.f32 %v1524, 1.0
    %v1588 = vadd.f32 %v1526, 1.0
    %v1589 = vadd.f32 %v1528, 1.0
    %v1590 = vadd.f32 %v1530, 1.0
    %v1591 = vadd.f32 %v1532, 1.0
    %v1592 = vadd.f32 %v1534, 1.0
    %v1593 = vadd.f32 %v1536, 1.0
    %v1594 = vadd.f32 %v1538, 1.0
    %v1595 = vadd.f32 %v1540, 1.0
    %v1596 = vadd.f32 %v1542, 1.0
    %v1597 = vadd.f32 %v1544, 1.0
    %v1598 = vadd.f32 %v1546, 1.0
    %v1599 = vadd.f32 %v1548, 1.0
    %v1600 = vadd.f32 %v1550, 1.0
    %v1601 = vadd.f32 %v1552, 1.0
    %v1602 = vadd.f32 %v1554, 1.0
    %v1603 = vadd.f32 %v1556, 1.0
    %v1604 = vadd.f32 %v1558, 1.0
    %v1605 = vadd.f32 %v1560, 1.0
    %v1606 = vadd.f32 %v1562, 1.0
    %v1607 = vadd.f32 %v1564, 1.0
    %v1608 = vadd.f32 %v1566, 1.0
    %v1609 = vadd.f32 %v1568, 1.0
    %v1610 = vadd.f32 %v1570, 1.0
    %v1611 = vadd.f32 %v1572, 1.0
    %v1612 = vadd.f32 %v1574, 1.0
    %v1613 = vadd.f32 %v1576, 1.0
    %v1614 = vadd.f32 %v1578, 1.0
    %v1615 = vadd.f32 %v1580, 1.0
    %v1616 = vadd.f32 %v1582, 1.0
    %v1617 = vadd.f32 %v1584, 1.0
    %v1618 = vadd.f32 %v1586, 1.0
    %v1619 = vrcp.pop %v1587
    %v1620 = vmul.f32 1.0, %v1619
    %v1621 = vrcp.pop %v1588
    %v1622 = vmul.f32 1.0, %v1621
    %v1623 = vrcp.pop %v1589
    %v1624 = vmul.f32 1.0, %v1623
    %v1625 = vrcp.pop %v1590
    %v1626 = vmul.f32 1.0, %v1625
    %v1627 = vrcp.pop %v1591
    %v1628 = vmul.f32 1.0, %v1627
    %v1629 = vrcp.pop %v1592
    %v1630 = vmul.f32 1.0, %v1629
    %v1631 = vrcp.pop %v1593
    %v1632 = vmul.f32 1.0, %v1631
    %v1633 = vrcp.pop %v1594
    %v1634 = vmul.f32 1.0, %v1633
    %v1635 = vrcp.pop %v1595
    %v1636 = vmul.f32 1.0, %v1635
    %v1637 = vrcp.pop %v1596
    %v1638 = vmul.f32 1.0, %v1637
    %v1639 = vrcp.pop %v1597
    %v1640 = vmul.f32 1.0, %v1639
    %v1641 = vrcp.pop %v1598
    %v1642 = vmul.f32 1.0, %v1641
    %v1643 = vrcp.pop %v1599
    %v1644 = vmul.f32 1.0, %v1643
    %v1645 = vrcp.pop %v1600
    %v1646 = vmul.f32 1.0, %v1645
    %v1647 = vrcp.pop %v1601
    %v1648 = vmul.f32 1.0, %v1647
    %v1649 = vrcp.pop %v1602
    %v1650 = vmul.f32 1.0, %v1649
    %v1651 = vrcp.pop %v1603
    %v1652 = vmul.f32 1.0, %v1651
    %v1653 = vrcp.pop %v1604
    %v1654 = vmul.f32 1.0, %v1653
    %v1655 = vrcp.pop %v1605
    %v1656 = vmul.f32 1.0, %v1655
    %v1657 = vrcp.pop %v1606
    %v1658 = vmul.f32 1.0, %v1657
    %v1659 = vrcp.pop %v1607
    %v1660 = vmul.f32 1.0, %v1659
    %v1661 = vrcp.pop %v1608
    %v1662 = vmul.f32 1.0, %v1661
    %v1663 = vrcp.pop %v1609
    %v1664 = vmul.f32 1.0, %v1663
    %v1665 = vrcp.pop %v1610
    %v1666 = vmul.f32 1.0, %v1665
    %v1667 = vrcp.pop %v1611
    %v1668 = vmul.f32 1.0, %v1667
    %v1669 = vrcp.pop %v1612
    %v1670 = vmul.f32 1.0, %v1669
    %v1671 = vrcp.pop %v1613
    %v1672 = vmul.f32 1.0, %v1671
    %v1673 = vrcp.pop %v1614
    %v1674 = vmul.f32 1.0, %v1673
    %v1675 = vrcp.pop %v1615
    %v1676 = vmul.f32 1.0, %v1675
    %v1677 = vrcp.pop %v1616
    %v1678 = vmul.f32 1.0, %v1677
    %v1679 = vrcp.pop %v1617
    %v1680 = vmul.f32 1.0, %v1679
    %v1681 = vrcp.pop %v1618
    %v1682 = vmul.f32 1.0, %v1681
    %v1683 = vmul.f32 %v927, %v71
    %v1684 = vmul.f32 %v929, %v72
    %v1685 = vmul.f32 %v931, %v73
    %v1686 = vmul.f32 %v933, %v74
    %v1687 = vmul.f32 %v935, %v75
    %v1688 = vmul.f32 %v937, %v76
    %v1689 = vmul.f32 %v939, %v77
    %v1690 = vmul.f32 %v941, %v78
    %v1691 = vmul.f32 %v943, %v79
    %v1692 = vmul.f32 %v945, %v80
    %v1693 = vmul.f32 %v947, %v81
    %v1694 = vmul.f32 %v949, %v82
    %v1695 = vmul.f32 %v951, %v83
    %v1696 = vmul.f32 %v953, %v84
    %v1697 = vmul.f32 %v955, %v85
    %v1698 = vmul.f32 %v957, %v86
    %v1699 = vmul.f32 %v959, %v87
    %v1700 = vmul.f32 %v961, %v88
    %v1701 = vmul.f32 %v963, %v89
    %v1702 = vmul.f32 %v965, %v90
    %v1703 = vmul.f32 %v967, %v91
    %v1704 = vmul.f32 %v969, %v92
    %v1705 = vmul.f32 %v971, %v93
    %v1706 = vmul.f32 %v973, %v94
    %v1707 = vmul.f32 %v975, %v95
    %v1708 = vmul.f32 %v977, %v96
    %v1709 = vmul.f32 %v979, %v97
    %v1710 = vmul.f32 %v981, %v98
    %v1711 = vmul.f32 %v983, %v99
    %v1712 = vmul.f32 %v985, %v100
    %v1713 = vmul.f32 %v987, %v101
    %v1714 = vmul.f32 %v989, %v102
    %v1715 = vld [vmem:[%s6] sm:$0xff]
    %v1716 = vld [vmem:[%s6 + $0x8] sm:$0xff]
    %v1717 = vld [vmem:[%s6 + $0x10] sm:$0xff]
    %v1718 = vld [vmem:[%s6 + $0x18] sm:$0xff]
    %v1719 = vld [vmem:[%s6 + $0x20] sm:$0xff]
    %v1720 = vld [vmem:[%s6 + $0x28] sm:$0xff]
    %v1721 = vld [vmem:[%s6 + $0x30] sm:$0xff]
    %v1722 = vld [vmem:[%s6 + $0x38] sm:$0xff]
    %v1723 = vld [vmem:[%s7] sm:$0xff]
    %v1724 = vld [vmem:[%s7 + $0x8] sm:$0xff]
    %v1725 = vld [vmem:[%s7 + $0x10] sm:$0xff]
    %v1726 = vld [vmem:[%s7 + $0x18] sm:$0xff]
    %v1728 = vsel %vm115, %v1683, 0
    %v1731 = vsel %vm115, %v1684, 0
    %v1734 = vsel %vm115, %v1685, 0
    %v1737 = vsel %vm115, %v1686, 0
    %v1740 = vsel %vm115, %v1687, 0
    %v1743 = vsel %vm115, %v1688, 0
    %v1746 = vsel %vm115, %v1689, 0
    %v1749 = vsel %vm115, %v1690, 0
    %v1752 = vsel %vm115, %v1691, 0
    %v1755 = vsel %vm115, %v1692, 0
    %v1758 = vsel %vm115, %v1693, 0
    %v1761 = vsel %vm115, %v1694, 0
    %v1764 = vsel %vm115, %v1695, 0
    %v1767 = vsel %vm115, %v1696, 0
    %v1770 = vsel %vm115, %v1697, 0
    %v1773 = vsel %vm115, %v1698, 0
    %v1776 = vsel %vm115, %v1699, 0
    %v1779 = vsel %vm115, %v1700, 0
    %v1782 = vsel %vm115, %v1701, 0
    %v1785 = vsel %vm115, %v1702, 0
    %v1788 = vsel %vm115, %v1703, 0
    %v1791 = vsel %vm115, %v1704, 0
    %v1794 = vsel %vm115, %v1705, 0
    %v1797 = vsel %vm115, %v1706, 0
    %v1800 = vsel %vm115, %v1707, 0
    %v1803 = vsel %vm115, %v1708, 0
    %v1806 = vsel %vm115, %v1709, 0
    %v1809 = vsel %vm115, %v1710, 0
    %v1812 = vsel %vm115, %v1711, 0
    %v1815 = vsel %vm115, %v1712, 0
    %v1818 = vsel %vm115, %v1713, 0
    %v1821 = vsel %vm115, %v1714, 0
    %1823 = vmatprep.subr.mxu0 0.0
    %1824 = vmatpush1.msra.mxu0 0.0
    %1825 = vmatprep.subr.mxu0 0.0
    %1826 = vmatpush1.msra.mxu0 0.0
    %1827 = vmatprep.subr.mxu0 0.0
    %1828 = vmatpush1.msra.mxu0 0.0
    %1829 = vmatprep.subr.mxu0 0.0
    %1830 = vmatpush1.msra.mxu0 0.0
    %1831 = vmatprep.subr.mxu0 0.0
    %1832 = vmatpush1.msra.mxu0 0.0
    %1833 = vmatprep.subr.mxu0 0.0
    %1834 = vmatpush1.msra.mxu0 0.0
    %1835 = vmatprep.subr.mxu0 0.0
    %1836 = vmatpush1.msra.mxu0 0.0
    %1837 = vmatprep.subr.mxu0 0.0
    %1838 = vmatpush1.msra.mxu0 0.0
    %1839 = vmatprep.subr.mxu0 0.0
    %1840 = vmatpush1.msra.mxu0 0.0
    %1841 = vmatprep.subr.mxu0 0.0
    %1842 = vmatpush1.msra.mxu0 0.0
    %1843 = vmatprep.subr.mxu0 0.0
    %1844 = vmatpush1.msra.mxu0 0.0
    %1845 = vmatprep.subr.mxu0 0.0
    %1846 = vmatpush1.msra.mxu0 0.0
    %1847 = vmatprep.subr.mxu0 0.0
    %1848 = vmatpush1.msra.mxu0 %v1726
    %1849 = vmatprep.subr.mxu0 0.0
    %1850 = vmatpush1.msra.mxu0 %v1725
    %1851 = vmatprep.subr.mxu0 0.0
    %1852 = vmatpush1.msra.mxu0 %v1724
    %1853 = vmatprep.subr.mxu0 0.0
    %1854 = vmatpush1.msra.mxu0 %v1723
    %1855 = vmatprep.subr.mxu0 0.0
    %1856 = vmatpush2.msra.mxu0 0.0
    %1857 = vmatprep.subr.mxu0 0.0
    %1858 = vmatpush2.msra.mxu0 0.0
    %1859 = vmatprep.subr.mxu0 0.0
    %1860 = vmatpush2.msra.mxu0 0.0
    %1861 = vmatprep.subr.mxu0 0.0
    %1862 = vmatpush2.msra.mxu0 0.0
    %1863 = vmatprep.subr.mxu0 0.0
    %1864 = vmatpush2.msra.mxu0 0.0
    %1865 = vmatprep.subr.mxu0 0.0
    %1866 = vmatpush2.msra.mxu0 0.0
    %1867 = vmatprep.subr.mxu0 0.0
    %1868 = vmatpush2.msra.mxu0 0.0
    %1869 = vmatprep.subr.mxu0 0.0
    %1870 = vmatpush2.msra.mxu0 0.0
    %1871 = vmatprep.subr.mxu0 0.0
    %1872 = vmatpush2.msra.mxu0 0.0
    %1873 = vmatprep.subr.mxu0 0.0
    %1874 = vmatpush2.msra.mxu0 0.0
    %1875 = vmatprep.subr.mxu0 0.0
    %1876 = vmatpush2.msra.mxu0 0.0
    %1877 = vmatprep.subr.mxu0 0.0
    %1878 = vmatpush2.msra.mxu0 0.0
    %1879 = vmatprep.subr.mxu0 0.0
    %1880 = vmatpush2.msra.mxu0 0.0
    %1881 = vmatprep.subr.mxu0 0.0
    %1882 = vmatpush2.msra.mxu0 0.0
    %1883 = vmatprep.subr.mxu0 0.0
    %1884 = vmatpush2.msra.mxu0 0.0
    %1885 = vmatprep.subr.mxu0 0.0
    %1886 = vmatpush2.msra.mxu0 0.0
    %1887 = vmatprep.mubr.f32.mxu0 0.0
    %1888 = vmatmul.mubr.f32.gmra.mxu0 %v1728
    %v1889 = vpop.f32.mrf.mxu0
    %v1890 = vadd.f32 0.0, %v1889
    %v1891 = vpop.f32.mrf.mxu0
    %1892 = vmatprep.mubr.f32.mxu0 0.0
    %1893 = vmatmul.mubr.f32.gmra.mxu0 %v1731
    %v1894 = vpop.f32.mrf.mxu0
    %v1895 = vadd.f32 0.0, %v1894
    %v1896 = vpop.f32.mrf.mxu0
    %1897 = vmatprep.mubr.f32.mxu0 0.0
    %1898 = vmatmul.mubr.f32.gmra.mxu0 %v1734
    %v1899 = vpop.f32.mrf.mxu0
    %v1900 = vadd.f32 0.0, %v1899
    %v1901 = vpop.f32.mrf.mxu0
    %1902 = vmatprep.mubr.f32.mxu0 0.0
    %1903 = vmatmul.mubr.f32.gmra.mxu0 %v1737
    %v1904 = vpop.f32.mrf.mxu0
    %v1905 = vadd.f32 0.0, %v1904
    %v1906 = vpop.f32.mrf.mxu0
    %1907 = vmatprep.mubr.f32.mxu0 0.0
    %1908 = vmatmul.mubr.f32.gmra.mxu0 %v1740
    %v1909 = vpop.f32.mrf.mxu0
    %v1910 = vadd.f32 0.0, %v1909
    %v1911 = vpop.f32.mrf.mxu0
    %1912 = vmatprep.mubr.f32.mxu0 0.0
    %1913 = vmatmul.mubr.f32.gmra.mxu0 %v1743
    %v1914 = vpop.f32.mrf.mxu0
    %v1915 = vadd.f32 0.0, %v1914
    %v1916 = vpop.f32.mrf.mxu0
    %1917 = vmatprep.mubr.f32.mxu0 0.0
    %1918 = vmatmul.mubr.f32.gmra.mxu0 %v1746
    %v1919 = vpop.f32.mrf.mxu0
    %v1920 = vadd.f32 0.0, %v1919
    %v1921 = vpop.f32.mrf.mxu0
    %1922 = vmatprep.mubr.f32.mxu0 0.0
    %1923 = vmatmul.mubr.f32.gmra.mxu0 %v1749
    %v1924 = vpop.f32.mrf.mxu0
    %v1925 = vadd.f32 0.0, %v1924
    %v1926 = vpop.f32.mrf.mxu0
    %1927 = vmatprep.mubr.f32.mxu0 0.0
    %1928 = vmatmul.mubr.f32.gmra.mxu0 %v1752
    %v1929 = vpop.f32.mrf.mxu0
    %v1930 = vadd.f32 0.0, %v1929
    %v1931 = vpop.f32.mrf.mxu0
    %1932 = vmatprep.mubr.f32.mxu0 0.0
    %1933 = vmatmul.mubr.f32.gmra.mxu0 %v1755
    %v1934 = vpop.f32.mrf.mxu0
    %v1935 = vadd.f32 0.0, %v1934
    %v1936 = vpop.f32.mrf.mxu0
    %1937 = vmatprep.mubr.f32.mxu0 0.0
    %1938 = vmatmul.mubr.f32.gmra.mxu0 %v1758
    %v1939 = vpop.f32.mrf.mxu0
    %v1940 = vadd.f32 0.0, %v1939
    %v1941 = vpop.f32.mrf.mxu0
    %1942 = vmatprep.mubr.f32.mxu0 0.0
    %1943 = vmatmul.mubr.f32.gmra.mxu0 %v1761
    %v1944 = vpop.f32.mrf.mxu0
    %v1945 = vadd.f32 0.0, %v1944
    %v1946 = vpop.f32.mrf.mxu0
    %1947 = vmatprep.mubr.f32.mxu0 0.0
    %1948 = vmatmul.mubr.f32.gmra.mxu0 %v1764
    %v1949 = vpop.f32.mrf.mxu0
    %v1950 = vadd.f32 0.0, %v1949
    %v1951 = vpop.f32.mrf.mxu0
    %1952 = vmatprep.mubr.f32.mxu0 0.0
    %1953 = vmatmul.mubr.f32.gmra.mxu0 %v1767
    %v1954 = vpop.f32.mrf.mxu0
    %v1955 = vadd.f32 0.0, %v1954
    %v1956 = vpop.f32.mrf.mxu0
    %1957 = vmatprep.mubr.f32.mxu0 0.0
    %1958 = vmatmul.mubr.f32.gmra.mxu0 %v1770
    %v1959 = vpop.f32.mrf.mxu0
    %v1960 = vadd.f32 0.0, %v1959
    %v1961 = vpop.f32.mrf.mxu0
    %1962 = vmatprep.mubr.f32.mxu0 0.0
    %1963 = vmatmul.mubr.f32.gmra.mxu0 %v1773
    %v1964 = vpop.f32.mrf.mxu0
    %v1965 = vadd.f32 0.0, %v1964
    %v1966 = vpop.f32.mrf.mxu0
    %1967 = vmatprep.mubr.f32.mxu0 0.0
    %1968 = vmatmul.mubr.f32.gmra.mxu0 %v1776
    %v1969 = vpop.f32.mrf.mxu0
    %v1970 = vadd.f32 0.0, %v1969
    %v1971 = vpop.f32.mrf.mxu0
    %1972 = vmatprep.mubr.f32.mxu0 0.0
    %1973 = vmatmul.mubr.f32.gmra.mxu0 %v1779
    %v1974 = vpop.f32.mrf.mxu0
    %v1975 = vadd.f32 0.0, %v1974
    %v1976 = vpop.f32.mrf.mxu0
    %1977 = vmatprep.mubr.f32.mxu0 0.0
    %1978 = vmatmul.mubr.f32.gmra.mxu0 %v1782
    %v1979 = vpop.f32.mrf.mxu0
    %v1980 = vadd.f32 0.0, %v1979
    %v1981 = vpop.f32.mrf.mxu0
    %1982 = vmatprep.mubr.f32.mxu0 0.0
    %1983 = vmatmul.mubr.f32.gmra.mxu0 %v1785
    %v1984 = vpop.f32.mrf.mxu0
    %v1985 = vadd.f32 0.0, %v1984
    %v1986 = vpop.f32.mrf.mxu0
    %1987 = vmatprep.mubr.f32.mxu0 0.0
    %1988 = vmatmul.mubr.f32.gmra.mxu0 %v1788
    %v1989 = vpop.f32.mrf.mxu0
    %v1990 = vadd.f32 0.0, %v1989
    %v1991 = vpop.f32.mrf.mxu0
    %1992 = vmatprep.mubr.f32.mxu0 0.0
    %1993 = vmatmul.mubr.f32.gmra.mxu0 %v1791
    %v1994 = vpop.f32.mrf.mxu0
    %v1995 = vadd.f32 0.0, %v1994
    %v1996 = vpop.f32.mrf.mxu0
    %1997 = vmatprep.mubr.f32.mxu0 0.0
    %1998 = vmatmul.mubr.f32.gmra.mxu0 %v1794
    %v1999 = vpop.f32.mrf.mxu0
    %v2000 = vadd.f32 0.0, %v1999
    %v2001 = vpop.f32.mrf.mxu0
    %2002 = vmatprep.mubr.f32.mxu0 0.0
    %2003 = vmatmul.mubr.f32.gmra.mxu0 %v1797
    %v2004 = vpop.f32.mrf.mxu0
    %v2005 = vadd.f32 0.0, %v2004
    %v2006 = vpop.f32.mrf.mxu0
    %2007 = vmatprep.mubr.f32.mxu0 0.0
    %2008 = vmatmul.mubr.f32.gmra.mxu0 %v1800
    %v2009 = vpop.f32.mrf.mxu0
    %v2010 = vadd.f32 0.0, %v2009
    %v2011 = vpop.f32.mrf.mxu0
    %2012 = vmatprep.mubr.f32.mxu0 0.0
    %2013 = vmatmul.mubr.f32.gmra.mxu0 %v1803
    %v2014 = vpop.f32.mrf.mxu0
    %v2015 = vadd.f32 0.0, %v2014
    %v2016 = vpop.f32.mrf.mxu0
    %2017 = vmatprep.mubr.f32.mxu0 0.0
    %2018 = vmatmul.mubr.f32.gmra.mxu0 %v1806
    %v2019 = vpop.f32.mrf.mxu0
    %v2020 = vadd.f32 0.0, %v2019
    %v2021 = vpop.f32.mrf.mxu0
    %2022 = vmatprep.mubr.f32.mxu0 0.0
    %2023 = vmatmul.mubr.f32.gmra.mxu0 %v1809
    %v2024 = vpop.f32.mrf.mxu0
    %v2025 = vadd.f32 0.0, %v2024
    %v2026 = vpop.f32.mrf.mxu0
    %2027 = vmatprep.mubr.f32.mxu0 0.0
    %2028 = vmatmul.mubr.f32.gmra.mxu0 %v1812
    %v2029 = vpop.f32.mrf.mxu0
    %v2030 = vadd.f32 0.0, %v2029
    %v2031 = vpop.f32.mrf.mxu0
    %2032 = vmatprep.mubr.f32.mxu0 0.0
    %2033 = vmatmul.mubr.f32.gmra.mxu0 %v1815
    %v2034 = vpop.f32.mrf.mxu0
    %v2035 = vadd.f32 0.0, %v2034
    %v2036 = vpop.f32.mrf.mxu0
    %2037 = vmatprep.mubr.f32.mxu0 0.0
    %2038 = vmatmul.mubr.f32.gmra.mxu0 %v1818
    %v2039 = vpop.f32.mrf.mxu0
    %v2040 = vadd.f32 0.0, %v2039
    %v2041 = vpop.f32.mrf.mxu0
    %2042 = vmatprep.mubr.f32.mxu0 0.0
    %2043 = vmatmul.mubr.f32.gmra.mxu0 %v1821
    %v2044 = vpop.f32.mrf.mxu0
    %v2045 = vadd.f32 0.0, %v2044
    %v2046 = vpop.f32.mrf.mxu0
    %2047 = vdwg.mxu0
    %2048 = vmatprep.subr.mxu0 0.0
    %2049 = vmatpush1.msra.mxu0 0.0
    %2050 = vmatprep.subr.mxu0 0.0
    %2051 = vmatpush1.msra.mxu0 0.0
    %2052 = vmatprep.subr.mxu0 0.0
    %2053 = vmatpush1.msra.mxu0 0.0
    %2054 = vmatprep.subr.mxu0 0.0
    %2055 = vmatpush1.msra.mxu0 0.0
    %2056 = vmatprep.subr.mxu0 0.0
    %2057 = vmatpush1.msra.mxu0 0.0
    %2058 = vmatprep.subr.mxu0 0.0
    %2059 = vmatpush1.msra.mxu0 0.0
    %2060 = vmatprep.subr.mxu0 0.0
    %2061 = vmatpush1.msra.mxu0 0.0
    %2062 = vmatprep.subr.mxu0 0.0
    %2063 = vmatpush1.msra.mxu0 0.0
    %2064 = vmatprep.subr.mxu0 0.0
    %2065 = vmatpush1.msra.mxu0 %v1722
    %2066 = vmatprep.subr.mxu0 0.0
    %2067 = vmatpush1.msra.mxu0 %v1721
    %2068 = vmatprep.subr.mxu0 0.0
    %2069 = vmatpush1.msra.mxu0 %v1720
    %2070 = vmatprep.subr.mxu0 0.0
    %2071 = vmatpush1.msra.mxu0 %v1719
    %2072 = vmatprep.subr.mxu0 0.0
    %2073 = vmatpush1.msra.mxu0 %v1718
    %2074 = vmatprep.subr.mxu0 0.0
    %2075 = vmatpush1.msra.mxu0 %v1717
    %2076 = vmatprep.subr.mxu0 0.0
    %2077 = vmatpush1.msra.mxu0 %v1716
    %2078 = vmatprep.subr.mxu0 0.0
    %2079 = vmatpush1.msra.mxu0 %v1715
    %2080 = vmatprep.subr.mxu0 0.0
    %2081 = vmatpush2.msra.mxu0 0.0
    %2082 = vmatprep.subr.mxu0 0.0
    %2083 = vmatpush2.msra.mxu0 0.0
    %2084 = vmatprep.subr.mxu0 0.0
    %2085 = vmatpush2.msra.mxu0 0.0
    %2086 = vmatprep.subr.mxu0 0.0
    %2087 = vmatpush2.msra.mxu0 0.0
    %2088 = vmatprep.subr.mxu0 0.0
    %2089 = vmatpush2.msra.mxu0 0.0
    %2090 = vmatprep.subr.mxu0 0.0
    %2091 = vmatpush2.msra.mxu0 0.0
    %2092 = vmatprep.subr.mxu0 0.0
    %2093 = vmatpush2.msra.mxu0 0.0
    %2094 = vmatprep.subr.mxu0 0.0
    %2095 = vmatpush2.msra.mxu0 0.0
    %2096 = vmatprep.subr.mxu0 0.0
    %2097 = vmatpush2.msra.mxu0 0.0
    %2098 = vmatprep.subr.mxu0 0.0
    %2099 = vmatpush2.msra.mxu0 0.0
    %2100 = vmatprep.subr.mxu0 0.0
    %2101 = vmatpush2.msra.mxu0 0.0
    %2102 = vmatprep.subr.mxu0 0.0
    %2103 = vmatpush2.msra.mxu0 0.0
    %2104 = vmatprep.subr.mxu0 0.0
    %2105 = vmatpush2.msra.mxu0 0.0
    %2106 = vmatprep.subr.mxu0 0.0
    %2107 = vmatpush2.msra.mxu0 0.0
    %2108 = vmatprep.subr.mxu0 0.0
    %2109 = vmatpush2.msra.mxu0 0.0
    %2110 = vmatprep.subr.mxu0 0.0
    %2111 = vmatpush2.msra.mxu0 0.0
    %2112 = vmatprep.mubr.f32.mxu0 0.0
    %2113 = vmatmul.mubr.f32.gmra.mxu0 %v439
    %v2114 = vpop.f32.mrf.mxu0
    %v2115 = vadd.f32 %v1890, %v2114
    %v2116 = vpop.f32.mrf.mxu0
    %2117 = vmatprep.mubr.f32.mxu0 0.0
    %2118 = vmatmul.mubr.f32.gmra.mxu0 %v442
    %v2119 = vpop.f32.mrf.mxu0
    %v2120 = vadd.f32 %v1895, %v2119
    %v2121 = vpop.f32.mrf.mxu0
    %2122 = vmatprep.mubr.f32.mxu0 0.0
    %2123 = vmatmul.mubr.f32.gmra.mxu0 %v445
    %v2124 = vpop.f32.mrf.mxu0
    %v2125 = vadd.f32 %v1900, %v2124
    %v2126 = vpop.f32.mrf.mxu0
    %2127 = vmatprep.mubr.f32.mxu0 0.0
    %2128 = vmatmul.mubr.f32.gmra.mxu0 %v448
    %v2129 = vpop.f32.mrf.mxu0
    %v2130 = vadd.f32 %v1905, %v2129
    %v2131 = vpop.f32.mrf.mxu0
    %2132 = vmatprep.mubr.f32.mxu0 0.0
    %2133 = vmatmul.mubr.f32.gmra.mxu0 %v451
    %v2134 = vpop.f32.mrf.mxu0
    %v2135 = vadd.f32 %v1910, %v2134
    %v2136 = vpop.f32.mrf.mxu0
    %2137 = vmatprep.mubr.f32.mxu0 0.0
    %2138 = vmatmul.mubr.f32.gmra.mxu0 %v454
    %v2139 = vpop.f32.mrf.mxu0
    %v2140 = vadd.f32 %v1915, %v2139
    %v2141 = vpop.f32.mrf.mxu0
    %2142 = vmatprep.mubr.f32.mxu0 0.0
    %2143 = vmatmul.mubr.f32.gmra.mxu0 %v457
    %v2144 = vpop.f32.mrf.mxu0
    %v2145 = vadd.f32 %v1920, %v2144
    %v2146 = vpop.f32.mrf.mxu0
    %2147 = vmatprep.mubr.f32.mxu0 0.0
    %2148 = vmatmul.mubr.f32.gmra.mxu0 %v460
    %v2149 = vpop.f32.mrf.mxu0
    %v2150 = vadd.f32 %v1925, %v2149
    %v2151 = vpop.f32.mrf.mxu0
    %2152 = vmatprep.mubr.f32.mxu0 0.0
    %2153 = vmatmul.mubr.f32.gmra.mxu0 %v463
    %v2154 = vpop.f32.mrf.mxu0
    %v2155 = vadd.f32 %v1930, %v2154
    %v2156 = vpop.f32.mrf.mxu0
    %2157 = vmatprep.mubr.f32.mxu0 0.0
    %2158 = vmatmul.mubr.f32.gmra.mxu0 %v466
    %v2159 = vpop.f32.mrf.mxu0
    %v2160 = vadd.f32 %v1935, %v2159
    %v2161 = vpop.f32.mrf.mxu0
    %2162 = vmatprep.mubr.f32.mxu0 0.0
    %2163 = vmatmul.mubr.f32.gmra.mxu0 %v469
    %v2164 = vpop.f32.mrf.mxu0
    %v2165 = vadd.f32 %v1940, %v2164
    %v2166 = vpop.f32.mrf.mxu0
    %2167 = vmatprep.mubr.f32.mxu0 0.0
    %2168 = vmatmul.mubr.f32.gmra.mxu0 %v472
    %v2169 = vpop.f32.mrf.mxu0
    %v2170 = vadd.f32 %v1945, %v2169
    %v2171 = vpop.f32.mrf.mxu0
    %2172 = vmatprep.mubr.f32.mxu0 0.0
    %2173 = vmatmul.mubr.f32.gmra.mxu0 %v475
    %v2174 = vpop.f32.mrf.mxu0
    %v2175 = vadd.f32 %v1950, %v2174
    %v2176 = vpop.f32.mrf.mxu0
    %2177 = vmatprep.mubr.f32.mxu0 0.0
    %2178 = vmatmul.mubr.f32.gmra.mxu0 %v478
    %v2179 = vpop.f32.mrf.mxu0
    %v2180 = vadd.f32 %v1955, %v2179
    %v2181 = vpop.f32.mrf.mxu0
    %2182 = vmatprep.mubr.f32.mxu0 0.0
    %2183 = vmatmul.mubr.f32.gmra.mxu0 %v481
    %v2184 = vpop.f32.mrf.mxu0
    %v2185 = vadd.f32 %v1960, %v2184
    %v2186 = vpop.f32.mrf.mxu0
    %2187 = vmatprep.mubr.f32.mxu0 0.0
    %2188 = vmatmul.mubr.f32.gmra.mxu0 %v484
    %v2189 = vpop.f32.mrf.mxu0
    %v2190 = vadd.f32 %v1965, %v2189
    %v2191 = vpop.f32.mrf.mxu0
    %2192 = vmatprep.mubr.f32.mxu0 0.0
    %2193 = vmatmul.mubr.f32.gmra.mxu0 %v487
    %v2194 = vpop.f32.mrf.mxu0
    %v2195 = vadd.f32 %v1970, %v2194
    %v2196 = vpop.f32.mrf.mxu0
    %2197 = vmatprep.mubr.f32.mxu0 0.0
    %2198 = vmatmul.mubr.f32.gmra.mxu0 %v490
    %v2199 = vpop.f32.mrf.mxu0
    %v2200 = vadd.f32 %v1975, %v2199
    %v2201 = vpop.f32.mrf.mxu0
    %2202 = vmatprep.mubr.f32.mxu0 0.0
    %2203 = vmatmul.mubr.f32.gmra.mxu0 %v493
    %v2204 = vpop.f32.mrf.mxu0
    %v2205 = vadd.f32 %v1980, %v2204
    %v2206 = vpop.f32.mrf.mxu0
    %2207 = vmatprep.mubr.f32.mxu0 0.0
    %2208 = vmatmul.mubr.f32.gmra.mxu0 %v496
    %v2209 = vpop.f32.mrf.mxu0
    %v2210 = vadd.f32 %v1985, %v2209
    %v2211 = vpop.f32.mrf.mxu0
    %2212 = vmatprep.mubr.f32.mxu0 0.0
    %2213 = vmatmul.mubr.f32.gmra.mxu0 %v499
    %v2214 = vpop.f32.mrf.mxu0
    %v2215 = vadd.f32 %v1990, %v2214
    %v2216 = vpop.f32.mrf.mxu0
    %2217 = vmatprep.mubr.f32.mxu0 0.0
    %2218 = vmatmul.mubr.f32.gmra.mxu0 %v502
    %v2219 = vpop.f32.mrf.mxu0
    %v2220 = vadd.f32 %v1995, %v2219
    %v2221 = vpop.f32.mrf.mxu0
    %2222 = vmatprep.mubr.f32.mxu0 0.0
    %2223 = vmatmul.mubr.f32.gmra.mxu0 %v505
    %v2224 = vpop.f32.mrf.mxu0
    %v2225 = vadd.f32 %v2000, %v2224
    %v2226 = vpop.f32.mrf.mxu0
    %2227 = vmatprep.mubr.f32.mxu0 0.0
    %2228 = vmatmul.mubr.f32.gmra.mxu0 %v508
    %v2229 = vpop.f32.mrf.mxu0
    %v2230 = vadd.f32 %v2005, %v2229
    %v2231 = vpop.f32.mrf.mxu0
    %2232 = vmatprep.mubr.f32.mxu0 0.0
    %2233 = vmatmul.mubr.f32.gmra.mxu0 %v511
    %v2234 = vpop.f32.mrf.mxu0
    %v2235 = vadd.f32 %v2010, %v2234
    %v2236 = vpop.f32.mrf.mxu0
    %2237 = vmatprep.mubr.f32.mxu0 0.0
    %2238 = vmatmul.mubr.f32.gmra.mxu0 %v514
    %v2239 = vpop.f32.mrf.mxu0
    %v2240 = vadd.f32 %v2015, %v2239
    %v2241 = vpop.f32.mrf.mxu0
    %2242 = vmatprep.mubr.f32.mxu0 0.0
    %2243 = vmatmul.mubr.f32.gmra.mxu0 %v517
    %v2244 = vpop.f32.mrf.mxu0
    %v2245 = vadd.f32 %v2020, %v2244
    %v2246 = vpop.f32.mrf.mxu0
    %2247 = vmatprep.mubr.f32.mxu0 0.0
    %2248 = vmatmul.mubr.f32.gmra.mxu0 %v520
    %v2249 = vpop.f32.mrf.mxu0
    %v2250 = vadd.f32 %v2025, %v2249
    %v2251 = vpop.f32.mrf.mxu0
    %2252 = vmatprep.mubr.f32.mxu0 0.0
    %2253 = vmatmul.mubr.f32.gmra.mxu0 %v523
    %v2254 = vpop.f32.mrf.mxu0
    %v2255 = vadd.f32 %v2030, %v2254
    %v2256 = vpop.f32.mrf.mxu0
    %2257 = vmatprep.mubr.f32.mxu0 0.0
    %2258 = vmatmul.mubr.f32.gmra.mxu0 %v526
    %v2259 = vpop.f32.mrf.mxu0
    %v2260 = vadd.f32 %v2035, %v2259
    %v2261 = vpop.f32.mrf.mxu0
    %2262 = vmatprep.mubr.f32.mxu0 0.0
    %2263 = vmatmul.mubr.f32.gmra.mxu0 %v529
    %v2264 = vpop.f32.mrf.mxu0
    %v2265 = vadd.f32 %v2040, %v2264
    %v2266 = vpop.f32.mrf.mxu0
    %2267 = vmatprep.mubr.f32.mxu0 0.0
    %2268 = vmatmul.mubr.f32.gmra.mxu0 %v532
    %v2269 = vpop.f32.mrf.mxu0
    %v2270 = vadd.f32 %v2045, %v2269
    %v2271 = vpop.f32.mrf.mxu0
    %2272 = vdwg.mxu0
    %v2273 = vld [vmem:[%s10] sm:$0x1]
    %v2275 = vlaneseq
    %v2276 = vshrl.u32 %v2275, 7
    %v2277 = vsub.s32 0, %v2276
    %v2278 = vrot.slane %v2273, %v2277
    %v2280 = vadd.f32 %v2115, %v2278
    %v2281 = vadd.f32 %v2120, %v2278
    %v2282 = vadd.f32 %v2125, %v2278
    %v2283 = vadd.f32 %v2130, %v2278
    %v2284 = vadd.f32 %v2135, %v2278
    %v2285 = vadd.f32 %v2140, %v2278
    %v2286 = vadd.f32 %v2145, %v2278
    %v2287 = vadd.f32 %v2150, %v2278
    %v2288 = vadd.f32 %v2155, %v2278
    %v2289 = vadd.f32 %v2160, %v2278
    %v2290 = vadd.f32 %v2165, %v2278
    %v2291 = vadd.f32 %v2170, %v2278
    %v2292 = vadd.f32 %v2175, %v2278
    %v2293 = vadd.f32 %v2180, %v2278
    %v2294 = vadd.f32 %v2185, %v2278
    %v2295 = vadd.f32 %v2190, %v2278
    %v2296 = vadd.f32 %v2195, %v2278
    %v2297 = vadd.f32 %v2200, %v2278
    %v2298 = vadd.f32 %v2205, %v2278
    %v2299 = vadd.f32 %v2210, %v2278
    %v2300 = vadd.f32 %v2215, %v2278
    %v2301 = vadd.f32 %v2220, %v2278
    %v2302 = vadd.f32 %v2225, %v2278
    %v2303 = vadd.f32 %v2230, %v2278
    %v2304 = vadd.f32 %v2235, %v2278
    %v2305 = vadd.f32 %v2240, %v2278
    %v2306 = vadd.f32 %v2245, %v2278
    %v2307 = vadd.f32 %v2250, %v2278
    %v2308 = vadd.f32 %v2255, %v2278
    %v2309 = vadd.f32 %v2260, %v2278
    %v2310 = vadd.f32 %v2265, %v2278
    %v2311 = vadd.f32 %v2270, %v2278
    %v2312 = vtanh.pop %v2280
    %v2313 = vtanh.pop %v2281
    %v2314 = vtanh.pop %v2282
    %v2315 = vtanh.pop %v2283
    %v2316 = vtanh.pop %v2284
    %v2317 = vtanh.pop %v2285
    %v2318 = vtanh.pop %v2286
    %v2319 = vtanh.pop %v2287
    %v2320 = vtanh.pop %v2288
    %v2321 = vtanh.pop %v2289
    %v2322 = vtanh.pop %v2290
    %v2323 = vtanh.pop %v2291
    %v2324 = vtanh.pop %v2292
    %v2325 = vtanh.pop %v2293
    %v2326 = vtanh.pop %v2294
    %v2327 = vtanh.pop %v2295
    %v2328 = vtanh.pop %v2296
    %v2329 = vtanh.pop %v2297
    %v2330 = vtanh.pop %v2298
    %v2331 = vtanh.pop %v2299
    %v2332 = vtanh.pop %v2300
    %v2333 = vtanh.pop %v2301
    %v2334 = vtanh.pop %v2302
    %v2335 = vtanh.pop %v2303
    %v2336 = vtanh.pop %v2304
    %v2337 = vtanh.pop %v2305
    %v2338 = vtanh.pop %v2306
    %v2339 = vtanh.pop %v2307
    %v2340 = vtanh.pop %v2308
    %v2341 = vtanh.pop %v2309
    %v2342 = vtanh.pop %v2310
    %v2343 = vtanh.pop %v2311
    %v2344 = vsub.f32 1.0, %v1620
    %v2345 = vsub.f32 1.0, %v1622
    %v2346 = vsub.f32 1.0, %v1624
    %v2347 = vsub.f32 1.0, %v1626
    %v2348 = vsub.f32 1.0, %v1628
    %v2349 = vsub.f32 1.0, %v1630
    %v2350 = vsub.f32 1.0, %v1632
    %v2351 = vsub.f32 1.0, %v1634
    %v2352 = vsub.f32 1.0, %v1636
    %v2353 = vsub.f32 1.0, %v1638
    %v2354 = vsub.f32 1.0, %v1640
    %v2355 = vsub.f32 1.0, %v1642
    %v2356 = vsub.f32 1.0, %v1644
    %v2357 = vsub.f32 1.0, %v1646
    %v2358 = vsub.f32 1.0, %v1648
    %v2359 = vsub.f32 1.0, %v1650
    %v2360 = vsub.f32 1.0, %v1652
    %v2361 = vsub.f32 1.0, %v1654
    %v2362 = vsub.f32 1.0, %v1656
    %v2363 = vsub.f32 1.0, %v1658
    %v2364 = vsub.f32 1.0, %v1660
    %v2365 = vsub.f32 1.0, %v1662
    %v2366 = vsub.f32 1.0, %v1664
    %v2367 = vsub.f32 1.0, %v1666
    %v2368 = vsub.f32 1.0, %v1668
    %v2369 = vsub.f32 1.0, %v1670
    %v2370 = vsub.f32 1.0, %v1672
    %v2371 = vsub.f32 1.0, %v1674
    %v2372 = vsub.f32 1.0, %v1676
    %v2373 = vsub.f32 1.0, %v1678
    %v2374 = vsub.f32 1.0, %v1680
    %v2375 = vsub.f32 1.0, %v1682
    %v2376 = vmul.f32 %v2344, %v71
    %v2377 = vmul.f32 %v2345, %v72
    %v2378 = vmul.f32 %v2346, %v73
    %v2379 = vmul.f32 %v2347, %v74
    %v2380 = vmul.f32 %v2348, %v75
    %v2381 = vmul.f32 %v2349, %v76
    %v2382 = vmul.f32 %v2350, %v77
    %v2383 = vmul.f32 %v2351, %v78
    %v2384 = vmul.f32 %v2352, %v79
    %v2385 = vmul.f32 %v2353, %v80
    %v2386 = vmul.f32 %v2354, %v81
    %v2387 = vmul.f32 %v2355, %v82
    %v2388 = vmul.f32 %v2356, %v83
    %v2389 = vmul.f32 %v2357, %v84
    %v2390 = vmul.f32 %v2358, %v85
    %v2391 = vmul.f32 %v2359, %v86
    %v2392 = vmul.f32 %v2360, %v87
    %v2393 = vmul.f32 %v2361, %v88
    %v2394 = vmul.f32 %v2362, %v89
    %v2395 = vmul.f32 %v2363, %v90
    %v2396 = vmul.f32 %v2364, %v91
    %v2397 = vmul.f32 %v2365, %v92
    %v2398 = vmul.f32 %v2366, %v93
    %v2399 = vmul.f32 %v2367, %v94
    %v2400 = vmul.f32 %v2368, %v95
    %v2401 = vmul.f32 %v2369, %v96
    %v2402 = vmul.f32 %v2370, %v97
    %v2403 = vmul.f32 %v2371, %v98
    %v2404 = vmul.f32 %v2372, %v99
    %v2405 = vmul.f32 %v2373, %v100
    %v2406 = vmul.f32 %v2374, %v101
    %v2407 = vmul.f32 %v2375, %v102
    %v2408 = vmul.f32 %v1620, %v2312
    %v2409 = vmul.f32 %v1622, %v2313
    %v2410 = vmul.f32 %v1624, %v2314
    %v2411 = vmul.f32 %v1626, %v2315
    %v2412 = vmul.f32 %v1628, %v2316
    %v2413 = vmul.f32 %v1630, %v2317
    %v2414 = vmul.f32 %v1632, %v2318
    %v2415 = vmul.f32 %v1634, %v2319
    %v2416 = vmul.f32 %v1636, %v2320
    %v2417 = vmul.f32 %v1638, %v2321
    %v2418 = vmul.f32 %v1640, %v2322
    %v2419 = vmul.f32 %v1642, %v2323
    %v2420 = vmul.f32 %v1644, %v2324
    %v2421 = vmul.f32 %v1646, %v2325
    %v2422 = vmul.f32 %v1648, %v2326
    %v2423 = vmul.f32 %v1650, %v2327
    %v2424 = vmul.f32 %v1652, %v2328
    %v2425 = vmul.f32 %v1654, %v2329
    %v2426 = vmul.f32 %v1656, %v2330
    %v2427 = vmul.f32 %v1658, %v2331
    %v2428 = vmul.f32 %v1660, %v2332
    %v2429 = vmul.f32 %v1662, %v2333
    %v2430 = vmul.f32 %v1664, %v2334
    %v2431 = vmul.f32 %v1666, %v2335
    %v2432 = vmul.f32 %v1668, %v2336
    %v2433 = vmul.f32 %v1670, %v2337
    %v2434 = vmul.f32 %v1672, %v2338
    %v2435 = vmul.f32 %v1674, %v2339
    %v2436 = vmul.f32 %v1676, %v2340
    %v2437 = vmul.f32 %v1678, %v2341
    %v2438 = vmul.f32 %v1680, %v2342
    %v2439 = vmul.f32 %v1682, %v2343
    %v2440 = vadd.f32 %v2376, %v2408
    %v2441 = vadd.f32 %v2377, %v2409
    %v2442 = vadd.f32 %v2378, %v2410
    %v2443 = vadd.f32 %v2379, %v2411
    %v2444 = vadd.f32 %v2380, %v2412
    %v2445 = vadd.f32 %v2381, %v2413
    %v2446 = vadd.f32 %v2382, %v2414
    %v2447 = vadd.f32 %v2383, %v2415
    %v2448 = vadd.f32 %v2384, %v2416
    %v2449 = vadd.f32 %v2385, %v2417
    %v2450 = vadd.f32 %v2386, %v2418
    %v2451 = vadd.f32 %v2387, %v2419
    %v2452 = vadd.f32 %v2388, %v2420
    %v2453 = vadd.f32 %v2389, %v2421
    %v2454 = vadd.f32 %v2390, %v2422
    %v2455 = vadd.f32 %v2391, %v2423
    %v2456 = vadd.f32 %v2392, %v2424
    %v2457 = vadd.f32 %v2393, %v2425
    %v2458 = vadd.f32 %v2394, %v2426
    %v2459 = vadd.f32 %v2395, %v2427
    %v2460 = vadd.f32 %v2396, %v2428
    %v2461 = vadd.f32 %v2397, %v2429
    %v2462 = vadd.f32 %v2398, %v2430
    %v2463 = vadd.f32 %v2399, %v2431
    %v2464 = vadd.f32 %v2400, %v2432
    %v2465 = vadd.f32 %v2401, %v2433
    %v2466 = vadd.f32 %v2402, %v2434
    %v2467 = vadd.f32 %v2403, %v2435
    %v2468 = vadd.f32 %v2404, %v2436
    %v2469 = vadd.f32 %v2405, %v2437
    %v2470 = vadd.f32 %v2406, %v2438
    %v2471 = vadd.f32 %v2407, %v2439
    %2472 = vst.msk [vmem:[#allocation2] sm:$0xff] %vm115, %v2440
    %2473 = vst.msk [vmem:[#allocation2 + $0x8] sm:$0xff] %vm115, %v2441
    %2474 = vst.msk [vmem:[#allocation2 + $0x10] sm:$0xff] %vm115, %v2442
    %2475 = vst.msk [vmem:[#allocation2 + $0x18] sm:$0xff] %vm115, %v2443
    %2476 = vst.msk [vmem:[#allocation2 + $0x20] sm:$0xff] %vm115, %v2444
    %2477 = vst.msk [vmem:[#allocation2 + $0x28] sm:$0xff] %vm115, %v2445
    %2478 = vst.msk [vmem:[#allocation2 + $0x30] sm:$0xff] %vm115, %v2446
    %2479 = vst.msk [vmem:[#allocation2 + $0x38] sm:$0xff] %vm115, %v2447
    %2480 = vst.msk [vmem:[#allocation2 + $0x40] sm:$0xff] %vm115, %v2448
    %2481 = vst.msk [vmem:[#allocation2 + $0x48] sm:$0xff] %vm115, %v2449
    %2482 = vst.msk [vmem:[#allocation2 + $0x50] sm:$0xff] %vm115, %v2450
    %2483 = vst.msk [vmem:[#allocation2 + $0x58] sm:$0xff] %vm115, %v2451
    %2484 = vst.msk [vmem:[#allocation2 + $0x60] sm:$0xff] %vm115, %v2452
    %2485 = vst.msk [vmem:[#allocation2 + $0x68] sm:$0xff] %vm115, %v2453
    %2486 = vst.msk [vmem:[#allocation2 + $0x70] sm:$0xff] %vm115, %v2454
    %2487 = vst.msk [vmem:[#allocation2 + $0x78] sm:$0xff] %vm115, %v2455
    %2488 = vst.msk [vmem:[#allocation2 + $0x80] sm:$0xff] %vm115, %v2456
    %2489 = vst.msk [vmem:[#allocation2 + $0x88] sm:$0xff] %vm115, %v2457
    %2490 = vst.msk [vmem:[#allocation2 + $0x90] sm:$0xff] %vm115, %v2458
    %2491 = vst.msk [vmem:[#allocation2 + $0x98] sm:$0xff] %vm115, %v2459
    %2492 = vst.msk [vmem:[#allocation2 + $0xa0] sm:$0xff] %vm115, %v2460
    %2493 = vst.msk [vmem:[#allocation2 + $0xa8] sm:$0xff] %vm115, %v2461
    %2494 = vst.msk [vmem:[#allocation2 + $0xb0] sm:$0xff] %vm115, %v2462
    %2495 = vst.msk [vmem:[#allocation2 + $0xb8] sm:$0xff] %vm115, %v2463
    %2496 = vst.msk [vmem:[#allocation2 + $0xc0] sm:$0xff] %vm115, %v2464
    %2497 = vst.msk [vmem:[#allocation2 + $0xc8] sm:$0xff] %vm115, %v2465
    %2498 = vst.msk [vmem:[#allocation2 + $0xd0] sm:$0xff] %vm115, %v2466
    %2499 = vst.msk [vmem:[#allocation2 + $0xd8] sm:$0xff] %vm115, %v2467
    %2500 = vst.msk [vmem:[#allocation2 + $0xe0] sm:$0xff] %vm115, %v2468
    %2501 = vst.msk [vmem:[#allocation2 + $0xe8] sm:$0xff] %vm115, %v2469
    %2502 = vst.msk [vmem:[#allocation2 + $0xf0] sm:$0xff] %vm115, %v2470
    %2503 = vst.msk [vmem:[#allocation2 + $0xf8] sm:$0xff] %vm115, %v2471
    // Predicated region
    $region46: #{propagator1.1} parent=1 // pred_check
      _
    $region47: #{propagator1.1} parent=1 // pred_check_branch
      %2505 = sbr.rel (0) target = $region49
    $region48: #{propagator1.1} parent=1 // pred_region
      %s2507 = ssub.s32 4096, 256
      %2508 = vsyncadd [#allocation3], %s2507
      %s2509 = sshll.u32 [#allocation2], 4
      %s2510 = int_to_ptr.vmem [resolvable:$true] %s2509
      %2515 = dma.vmem_to_hbm [thread:$0]  %s2510, 256, %s11, [#allocation3], 128, 128, 8
    $region49: #{propagator1.1} parent=1 // pred_fallthru
      _
    // Predicated region
    $region50: #{propagator1.1} parent=1 // pred_check
      _
    $region51: #{propagator1.1} parent=1 // pred_check_branch
      %2517 = sbr.rel (0) target = $region53
    $region52: #{propagator1.1} parent=1 // pred_region
      %2518 = dma.done [#allocation3], 4096
    $region53: #{propagator1.1} parent=1 // pred_fallthru
      _
    %2519 = vsyncpa [#allocation3], 1

</llo_original>
